<compile_context>
chip_gen: v6e
topology: v6e:2x2x1
jax: 0.10.0
libtpu: 0.0.40
codegen_flags: <defaults>
</compile_context>

<pallas_src>
import jax
import jax.numpy as jnp
from jax.experimental import pallas as pl
from jax.experimental.pallas import tpu as pltpu

FP = 128   # padded feature width (lane granule) for F
OP = 128   # padded fused head width (policy | value | zeros)


def actor_critic_kernel(
    img_ref,    # (Bt, HW, C)   bf16   channels on lanes
    mask_ref,   # (Bt, HWm)     bf16
    we_ref,     # (C, FP)       f32    embed Linear weight (bias folded into head)
    wm_ref,     # (HWm, FP)     f32    simplified mask-branch Linear weight
    whe_ref,    # (FP, OP)      f32    fused head weight, embed half  [Wp | Wv | 0]
    whm_ref,    # (FP, OP)      f32    fused head weight, mask half   [Wp | Wv | 0]
    bias_ref,   # (2, OP)       f32    row0 = mask-branch bias, row1 = fused head bias
    pv_ref,     # out: (Bt, OP) f32    cols[:out_dim]=policy, col[out_dim]=value
):
    # --- embed branch: AdaptiveAvgPool2d(1) + Flatten + Linear(256, F) ---
    # mean over the spatial (sublane) axis; C stays lane-dense.
    pooled = jnp.mean(img_ref[...].astype(jnp.float32), axis=1)          # (Bt, C)
    embed_out = jnp.dot(pooled, we_ref[...],
                        preferred_element_type=jnp.float32)              # (Bt, FP)

    # --- mask branch (simplified): Flatten + Linear + ReLU ---
    mask = mask_ref[...].astype(jnp.float32)                             # (Bt, HWm)
    mask_out = jnp.maximum(
        jnp.dot(mask, wm_ref[...], preferred_element_type=jnp.float32)
        + bias_ref[0:1, :],
        0.0,
    )                                                                    # (Bt, FP)

    # --- concat + dropout(eval=identity) + fused policy|value head ---
    pv_ref[...] = (
        jnp.dot(embed_out, whe_ref[...], preferred_element_type=jnp.float32)
        + jnp.dot(mask_out, whm_ref[...], preferred_element_type=jnp.float32)
        + bias_ref[1:2, :]
    )


def _round_up(x, m):
    return ((x + m - 1) // m) * m


def _choose_batch_tile(B, hw, c_img):
    """Keep the double-buffered bf16 img tile ~<=8 MiB (v7x-safe), cap at 128."""
    row_bytes = hw * c_img * 2  # bf16
    bt = max(8, min(128, (4 * 1024 * 1024) // max(row_bytes, 1)))
    bt = max(8, (bt // 8) * 8)
    bt = min(bt, _round_up(B, 8))   # don't tile beyond the (padded) batch
    return bt


def _pack_params(params):
    """Pad F/out_dim to 128 lanes, fuse policy+value heads, fold embed bias."""
    f32 = jnp.float32
    we = params["we"].astype(f32)               # (C, F)
    wm = params["wm"].astype(f32)               # (HWm, F)
    C, F = we.shape
    HWm = wm.shape[0]
    out_dim = params["wp"].shape[1]

    we_p = jnp.zeros((C, FP), f32).at[:, :F].set(we)
    wm_p = jnp.zeros((HWm, FP), f32).at[:, :F].set(wm)

    wp_e, wp_m = params["wp"][:F].astype(f32), params["wp"][F:].astype(f32)
    wv_e, wv_m = params["wv"][:F].astype(f32), params["wv"][F:].astype(f32)

    whe = (jnp.zeros((FP, OP), f32)
           .at[:F, :out_dim].set(wp_e)
           .at[:F, out_dim].set(wv_e[:, 0]))
    whm = (jnp.zeros((FP, OP), f32)
           .at[:F, :out_dim].set(wp_m)
           .at[:F, out_dim].set(wv_m[:, 0]))

    bm_p = jnp.zeros((1, FP), f32).at[0, :F].set(params["bm"][0].astype(f32))
    bh = (jnp.zeros((1, OP), f32)
          .at[0, :out_dim].set(params["bp"][0].astype(f32))
          .at[0, out_dim].set(params["bv"][0, 0].astype(f32)))
    # fold the embed-branch bias into the fused head bias (exact):
    # (pooled@We + be)@Wh_e = pooled@We@Wh_e + be@Wh_e
    be_p = jnp.zeros((1, FP), f32).at[0, :F].set(params["be"][0].astype(f32))
    bh_total = bh + be_p @ whe

    biases = jnp.concatenate([bm_p, bh_total], axis=0)   # (2, 128)
    return we_p, wm_p, whe, whm, biases, out_dim


def actor_critic_forward(x_img, x_mask, params):
    """x_img: (B, 256, H, W) NCHW; x_mask: (B, 1, Hm, Wm) NCHW."""
    B, C, H, W = x_img.shape
    _, _, Hm, Wm = x_mask.shape
    HW, HWm = H * W, Hm * Wm

    # lane-friendly layouts + bf16 storage for the big HBM tensors
    img = jnp.transpose(x_img, (0, 2, 3, 1)).reshape(B, HW, C).astype(jnp.bfloat16)
    mask = x_mask.reshape(B, HWm).astype(jnp.bfloat16)

    bt = _choose_batch_tile(B, HW, C)
    Bp = _round_up(B, bt)
    if Bp != B:
        img = jnp.pad(img, ((0, Bp - B), (0, 0), (0, 0)))
        mask = jnp.pad(mask, ((0, Bp - B), (0, 0)))

    we_p, wm_p, whe, whm, biases, out_dim = _pack_params(params)

    pv = pl.pallas_call(
        actor_critic_kernel,
        out_shape=jax.ShapeDtypeStruct((Bp, OP), jnp.float32),
        grid=(Bp // bt,),
        in_specs=[
            pl.BlockSpec((bt, HW, C), lambda i: (i, 0, 0)),   # img tile
            pl.BlockSpec((bt, HWm), lambda i: (i, 0)),        # mask tile
            pl.BlockSpec((C, FP), lambda i: (0, 0)),          # weights stay VMEM-resident
            pl.BlockSpec((HWm, FP), lambda i: (0, 0)),
            pl.BlockSpec((FP, OP), lambda i: (0, 0)),
            pl.BlockSpec((FP, OP), lambda i: (0, 0)),
            pl.BlockSpec((2, OP), lambda i: (0, 0)),
        ],
        out_specs=pl.BlockSpec((bt, OP), lambda i: (i, 0)),
        compiler_params=pltpu.CompilerParams(
            dimension_semantics=("parallel",),
            vmem_limit_bytes=48 * 1024 * 1024,
        ),
    )(img, mask, we_p, wm_p, whe, whm, biases)

    p = pv[:B, :out_dim]
    v = pv[:B, out_dim:out_dim + 1]
    return p, v


def make_params(key, c_img, hw_mask, flattened_neurons, out_dim):
    """Deterministic synthetic parameters (shapes follow the module __init__)."""
    ks = jax.random.split(key, 8)
    s = 0.05
    F = flattened_neurons
    return {
        # embed_branch Linear(256, F), stored transposed as (256, F)
        "we": s * jax.random.normal(ks[0], (c_img, F), jnp.float32),
        "be": s * jax.random.normal(ks[1], (1, F), jnp.float32),
        # simplified mask branch Linear(Hm*Wm, F)
        "wm": s * jax.random.normal(ks[2], (hw_mask, F), jnp.float32),
        "bm": s * jax.random.normal(ks[3], (1, F), jnp.float32),
        # policy Linear(2F, out_dim), value Linear(2F, 1)
        "wp": s * jax.random.normal(ks[4], (2 * F, out_dim), jnp.float32),
        "bp": s * jax.random.normal(ks[5], (1, out_dim), jnp.float32),
        "wv": s * jax.random.normal(ks[6], (2 * F, 1), jnp.float32),
        "bv": s * jax.random.normal(ks[7], (1, 1), jnp.float32),
    }


def reference_forward(x_img, x_mask, params):
    """Pure-JAX reference with the same bf16 input quantization the kernel uses."""
    B, C, H, W = x_img.shape
    _, _, Hm, Wm = x_mask.shape
    img = x_img.astype(jnp.bfloat16).astype(jnp.float32)
    mask = x_mask.astype(jnp.bfloat16).astype(jnp.float32)
    pooled = jnp.mean(img.reshape(B, C, H * W), axis=-1)
    embed_out = pooled @ params["we"] + params["be"]
    mask_out = jnp.maximum(mask.reshape(B, Hm * Wm) @ params["wm"] + params["bm"], 0.0)
    x = jnp.concatenate([embed_out, mask_out], axis=1)
    p = x @ params["wp"] + params["bp"]
    v = x @ params["wv"] + params["bv"]
    return p, v


if __name__ == "__main__":
    B = 2
    C_IMG = 256          # SAM image-embedding channels (Linear(256, F) in module)
    H = W = 16
    HM = WM = 32         # segmentation mask spatial size
    F = 32               # flattened_neurons (mask_branch.last_layer_num), small synthetic
    OUT_DIM = 4

    key = jax.random.PRNGKey(0)
    k_img, k_mask, k_param = jax.random.split(key, 3)

    x_img = jax.random.normal(k_img, (B, C_IMG, H, W), jnp.float32)
    x_mask = (jax.random.uniform(k_mask, (B, 1, HM, WM)) > 0.5).astype(jnp.float32)
    params = make_params(k_param, C_IMG, HM * WM, F, OUT_DIM)

    p, v = actor_critic_forward(x_img, x_mask, params)
    p, v = jax.block_until_ready((p, v))

    p_ref, v_ref = reference_forward(x_img, x_mask, params)
    assert p.shape == (B, OUT_DIM) and v.shape == (B, 1)
    assert jnp.allclose(p, p_ref, atol=5e-4, rtol=5e-4)
    assert jnp.allclose(v, v_ref, atol=5e-4, rtol=5e-4)

    print("KERNEL_OK")
</pallas_src>

<mosaic_0001>
module attributes {stable_mosaic.version = 11 : i64} {
  func.func @actor_critic_kernel(%arg0: i32, %arg1: memref<8x256x256xbf16, #tpu.memory_space<vmem>>, %arg2: memref<8x1024xbf16, #tpu.memory_space<vmem>>, %arg3: memref<256x128xf32, #tpu.memory_space<vmem>>, %arg4: memref<1024x128xf32, #tpu.memory_space<vmem>>, %arg5: memref<128x128xf32, #tpu.memory_space<vmem>>, %arg6: memref<128x128xf32, #tpu.memory_space<vmem>>, %arg7: memref<2x128xf32, #tpu.memory_space<vmem>>, %arg8: memref<8x128xf32, #tpu.memory_space<vmem>>) attributes {dimension_semantics = [#tpu.dimension_semantics<parallel>], iteration_bounds = array<i64: 1>, scalar_prefetch = 0 : i64, scratch_operands = 0 : i64, tpu.core_type = #tpu.core_type<tc>, window_params = [{transform_indices = @transform_0, window_bounds = array<i64: 8, 256, 256>}, {transform_indices = @transform_1, window_bounds = array<i64: 8, 1024>}, {pipeline_mode = #tpu.pipeline_mode<synchronous>, transform_indices = @transform_2, window_bounds = array<i64: 256, 128>}, {pipeline_mode = #tpu.pipeline_mode<synchronous>, transform_indices = @transform_3, window_bounds = array<i64: 1024, 128>}, {pipeline_mode = #tpu.pipeline_mode<synchronous>, transform_indices = @transform_4, window_bounds = array<i64: 128, 128>}, {pipeline_mode = #tpu.pipeline_mode<synchronous>, transform_indices = @transform_5, window_bounds = array<i64: 128, 128>}, {pipeline_mode = #tpu.pipeline_mode<synchronous>, transform_indices = @transform_6, window_bounds = array<i64: 2, 128>}, {transform_indices = @transform_7, window_bounds = array<i64: 8, 128>}]} {
    %c0 = arith.constant 0 : index
    %c0_0 = arith.constant 0 : index
    %c0_1 = arith.constant 0 : index
    %0 = vector.load %arg1[%c0, %c0_0, %c0_1] : memref<8x256x256xbf16, #tpu.memory_space<vmem>>, vector<8x256x256xbf16>
    %1 = arith.extf %0 : vector<8x256x256xbf16> to vector<8x256x256xf32>
    %cst = arith.constant dense<0.000000e+00> : vector<8x256xf32>
    %2 = vector.multi_reduction <add>, %1, %cst [1] : vector<8x256x256xf32> to vector<8x256xf32>
    %cst_2 = arith.constant 2.560000e+02 : f32
    %3 = vector.broadcast %cst_2 : f32 to vector<8x256xf32>
    %4 = arith.divf %2, %3 : vector<8x256xf32>
    %c0_3 = arith.constant 0 : index
    %c0_4 = arith.constant 0 : index
    %5 = vector.load %arg3[%c0_3, %c0_4] : memref<256x128xf32, #tpu.memory_space<vmem>>, vector<256x128xf32>
    %cst_5 = arith.constant dense<0.000000e+00> : vector<8x128xf32>
    %6 = tpu.matmul %4, %5, %cst_5 {dimension_numbers = #tpu.dot_dimension_numbers<[1], [0], [0], [1], [0, 0, 1, 1], [], []>} : vector<8x256xf32>, vector<256x128xf32>, vector<8x128xf32> -> vector<8x128xf32>
    %c0_6 = arith.constant 0 : index
    %c0_7 = arith.constant 0 : index
    %7 = vector.load %arg2[%c0_6, %c0_7] : memref<8x1024xbf16, #tpu.memory_space<vmem>>, vector<8x1024xbf16>
    %8 = arith.extf %7 : vector<8x1024xbf16> to vector<8x1024xf32>
    %c0_8 = arith.constant 0 : index
    %c0_9 = arith.constant 0 : index
    %9 = vector.load %arg4[%c0_8, %c0_9] : memref<1024x128xf32, #tpu.memory_space<vmem>>, vector<1024x128xf32>
    %cst_10 = arith.constant dense<0.000000e+00> : vector<8x128xf32>
    %10 = tpu.matmul %8, %9, %cst_10 {dimension_numbers = #tpu.dot_dimension_numbers<[1], [0], [0], [1], [0, 0, 1, 1], [], []>} : vector<8x1024xf32>, vector<1024x128xf32>, vector<8x128xf32> -> vector<8x128xf32>
    %c0_11 = arith.constant 0 : index
    %c0_12 = arith.constant 0 : index
    %11 = vector.load %arg7[%c0_11, %c0_12] : memref<2x128xf32, #tpu.memory_space<vmem>>, vector<1x128xf32>
    %12 = vector.broadcast %11 : vector<1x128xf32> to vector<8x128xf32>
    %13 = arith.addf %10, %12 : vector<8x128xf32>
    %cst_13 = arith.constant 0.000000e+00 : f32
    %14 = vector.broadcast %cst_13 : f32 to vector<8x128xf32>
    %15 = arith.maximumf %13, %14 : vector<8x128xf32>
    %c0_14 = arith.constant 0 : index
    %c0_15 = arith.constant 0 : index
    %16 = vector.load %arg5[%c0_14, %c0_15] : memref<128x128xf32, #tpu.memory_space<vmem>>, vector<128x128xf32>
    %cst_16 = arith.constant dense<0.000000e+00> : vector<8x128xf32>
    %17 = tpu.matmul %6, %16, %cst_16 {dimension_numbers = #tpu.dot_dimension_numbers<[1], [0], [0], [1], [0, 0, 1, 1], [], []>} : vector<8x128xf32>, vector<128x128xf32>, vector<8x128xf32> -> vector<8x128xf32>
    %c0_17 = arith.constant 0 : index
    %c0_18 = arith.constant 0 : index
    %18 = vector.load %arg6[%c0_17, %c0_18] : memref<128x128xf32, #tpu.memory_space<vmem>>, vector<128x128xf32>
    %cst_19 = arith.constant dense<0.000000e+00> : vector<8x128xf32>
    %19 = tpu.matmul %15, %18, %cst_19 {dimension_numbers = #tpu.dot_dimension_numbers<[1], [0], [0], [1], [0, 0, 1, 1], [], []>} : vector<8x128xf32>, vector<128x128xf32>, vector<8x128xf32> -> vector<8x128xf32>
    %20 = arith.addf %17, %19 : vector<8x128xf32>
    %c1 = arith.constant 1 : index
    %c0_20 = arith.constant 0 : index
    %21 = vector.load %arg7[%c1, %c0_20] : memref<2x128xf32, #tpu.memory_space<vmem>>, vector<1x128xf32>
    %22 = vector.broadcast %21 : vector<1x128xf32> to vector<8x128xf32>
    %23 = arith.addf %20, %22 : vector<8x128xf32>
    %c0_21 = arith.constant 0 : index
    %c0_22 = arith.constant 0 : index
    %24 = vector.load %arg8[%c0_21, %c0_22] : memref<8x128xf32, #tpu.memory_space<vmem>>, vector<8x128xf32>
    tpu.vector_store %arg8[%c0_21, %c0_22], %23 {strides = array<i32>} : memref<8x128xf32, #tpu.memory_space<vmem>>, vector<8x128xf32>,
    return
  }
  func.func @transform_0(%arg0: i32) -> (i32, i32, i32) {
    %c0_i32 = arith.constant 0 : i32
    %c0_i32_0 = arith.constant 0 : i32
    %c0_i32_1 = arith.constant 0 : i32
    return %arg0, %c0_i32, %c0_i32_0 : i32, i32, i32
  }
  func.func @transform_1(%arg0: i32) -> (i32, i32) {
    %c0_i32 = arith.constant 0 : i32
    %c0_i32_0 = arith.constant 0 : i32
    return %arg0, %c0_i32 : i32, i32
  }
  func.func @transform_2(%arg0: i32) -> (i32, i32) {
    %c0_i32 = arith.constant 0 : i32
    %c0_i32_0 = arith.constant 0 : i32
    %c0_i32_1 = arith.constant 0 : i32
    return %c0_i32, %c0_i32_0 : i32, i32
  }
  func.func @transform_3(%arg0: i32) -> (i32, i32) {
    %c0_i32 = arith.constant 0 : i32
    %c0_i32_0 = arith.constant 0 : i32
    %c0_i32_1 = arith.constant 0 : i32
    return %c0_i32, %c0_i32_0 : i32, i32
  }
  func.func @transform_4(%arg0: i32) -> (i32, i32) {
    %c0_i32 = arith.constant 0 : i32
    %c0_i32_0 = arith.constant 0 : i32
    %c0_i32_1 = arith.constant 0 : i32
    return %c0_i32, %c0_i32_0 : i32, i32
  }
  func.func @transform_5(%arg0: i32) -> (i32, i32) {
    %c0_i32 = arith.constant 0 : i32
    %c0_i32_0 = arith.constant 0 : i32
    %c0_i32_1 = arith.constant 0 : i32
    return %c0_i32, %c0_i32_0 : i32, i32
  }
  func.func @transform_6(%arg0: i32) -> (i32, i32) {
    %c0_i32 = arith.constant 0 : i32
    %c0_i32_0 = arith.constant 0 : i32
    %c0_i32_1 = arith.constant 0 : i32
    return %c0_i32, %c0_i32_0 : i32, i32
  }
  func.func @transform_7(%arg0: i32) -> (i32, i32) {
    %c0_i32 = arith.constant 0 : i32
    %c0_i32_0 = arith.constant 0 : i32
    return %arg0, %c0_i32 : i32, i32
  }
}

</mosaic_0001>

<llo_original>
// kernel: tpu_custom_call.1
$region0: #{tpu_custom_call.1}
  #allocation0 [shape = 'u32[]', space=smem, size = 0x4, offset = 0x4, fixed_abs, tag = 'smem constant byte address 0x4 - core index']
  #allocation1 [shape = 'u32[144,128]{1,0:T(1,128)}', space=vmem, size = 0x12000, scoped, tag = 'internal scratch']
  %s0 = inlined_call_operand.hbm [shape: bf16[8,256,256], index: 0, kind: input, shape index: {}]
  %s1 = inlined_call_operand.hbm [shape: bf16[8,1024], index: 1, kind: input, shape index: {}]
  %s2 = inlined_call_operand.hbm [shape: f32[256,128], index: 2, kind: input, shape index: {}]
  %s3 = inlined_call_operand.hbm [shape: f32[1024,128], index: 3, kind: input, shape index: {}]
  %s4 = inlined_call_operand.hbm [shape: f32[128,128], index: 4, kind: input, shape index: {}]
  %s5 = inlined_call_operand.hbm [shape: f32[128,128], index: 5, kind: input, shape index: {}]
  %s6 = inlined_call_operand.vmem [shape: f32[2,128], index: 6, kind: input, shape index: {}]
  %s7 = inlined_call_operand.hbm [shape: f32[8,128], index: 7, kind: output, shape index: {}]
  %s8 = sld [smem:[#allocation0]]
  $region62: #{tpu_custom_call.1} parent=0
    _
  %s10 = ssub.s32 1, %s8
  %s11 = scalar_select 0, %s10, %s8
  $region1: #{tpu_custom_call.1} parent=0
    #allocation2 [shape = 'u8[1048576]{0}', space=vmem, size = 0x100000, scoped, tag = 'input window, operand 0, single buffered']
    #allocation3 [shape = 's32[1]{0}', space=sflag, size = 0x4, scoped, tag = 'scoped memory for tpu_custom_call.1']
    #allocation4 [shape = 's32[1]{0}', space=sflag, size = 0x4, scoped, tag = 'scoped memory for tpu_custom_call.1']
    #allocation5 [shape = 'u8[16384]{0}', space=vmem, size = 0x4000, scoped, tag = 'input window, operand 1, single buffered']
    #allocation6 [shape = 's32[1]{0}', space=sflag, size = 0x4, scoped, tag = 'scoped memory for tpu_custom_call.1']
    #allocation7 [shape = 'u8[131072]{0}', space=vmem, size = 0x20000, scoped, tag = 'input window, operand 2, single buffered']
    #allocation8 [shape = 'u8[524288]{0}', space=vmem, size = 0x80000, scoped, tag = 'input window, operand 3, single buffered']
    #allocation9 [shape = 's32[1]{0}', space=sflag, size = 0x4, scoped, tag = 'scoped memory for tpu_custom_call.1']
    #allocation10 [shape = 'u8[65536]{0}', space=vmem, size = 0x10000, scoped, tag = 'input window, operand 4, single buffered']
    #allocation11 [shape = 'u8[65536]{0}', space=vmem, size = 0x10000, scoped, tag = 'input window, operand 5, single buffered']
    #allocation12 [shape = 's32[1]{0}', space=sflag, size = 0x4, scoped, tag = 'scoped memory for tpu_custom_call.1']
    #allocation13 [shape = 'u8[4096]{0}', space=vmem, size = 0x1000, scoped, tag = 'output window, operand 0, single buffered']
    %12 = vsyncpa [#allocation3], 0
    %13 = vsyncpa [#allocation6], 0
    %14 = vsyncpa [#allocation9], 0
    %15 = vsyncpa [#allocation12], 0
    %16 = vsyncpa [#allocation4], 0
    // Predicated region
    $region2: #{tpu_custom_call.1} parent=1 // pred_check
      _
    $region3: #{tpu_custom_call.1} parent=1 // pred_check_branch
      %18 = sbr.rel (0) target = $region5
    $region4: #{tpu_custom_call.1} parent=1 // pred_region
      %s20 = ssub.s32 32768, 32768
      %21 = vsyncadd [#allocation3], %s20
      %s22 = sshll.u32 [#allocation2], 4
      %s23 = int_to_ptr.vmem [resolvable:$true] %s22
      %28 = dma.hbm_to_vmem [thread:$0]  %s0, 32768, %s23, [#allocation3], 128, 128, 8
    $region5: #{tpu_custom_call.1} parent=1 // pred_fallthru
      _
    // Predicated region
    $region6: #{tpu_custom_call.1} parent=1 // pred_check
      _
    $region7: #{tpu_custom_call.1} parent=1 // pred_check_branch
      %30 = sbr.rel (0) target = $region9
    $region8: #{tpu_custom_call.1} parent=1 // pred_region
      %s32 = ssub.s32 512, 512
      %33 = vsyncadd [#allocation6], %s32
      %s35 = sshll.u32 [#allocation5], 4
      %s36 = int_to_ptr.vmem [resolvable:$true] %s35
      %38 = dma.hbm_to_vmem [thread:$0]  %s1, 512, %s36, [#allocation6]
    $region9: #{tpu_custom_call.1} parent=1 // pred_fallthru
      _
    // Predicated region
    $region10: #{tpu_custom_call.1} parent=1 // pred_check
      _
    $region11: #{tpu_custom_call.1} parent=1 // pred_check_branch
      %40 = sbr.rel (0) target = $region13
    $region12: #{tpu_custom_call.1} parent=1 // pred_region
      %s42 = ssub.s32 4096, 4096
      %43 = vsyncadd [#allocation6], %s42
      %s44 = sshll.u32 [#allocation7], 4
      %s45 = int_to_ptr.vmem [resolvable:$true] %s44
      %50 = dma.hbm_to_vmem [thread:$0]  %s2, 4096, %s45, [#allocation6], 128, 128, 8
    $region13: #{tpu_custom_call.1} parent=1 // pred_fallthru
      _
    // Predicated region
    $region14: #{tpu_custom_call.1} parent=1 // pred_check
      _
    $region15: #{tpu_custom_call.1} parent=1 // pred_check_branch
      %52 = sbr.rel (0) target = $region17
    $region16: #{tpu_custom_call.1} parent=1 // pred_region
      %s54 = ssub.s32 16384, 16384
      %55 = vsyncadd [#allocation9], %s54
      %s56 = sshll.u32 [#allocation8], 4
      %s57 = int_to_ptr.vmem [resolvable:$true] %s56
      %62 = dma.hbm_to_vmem [thread:$0]  %s3, 16384, %s57, [#allocation9], 128, 128, 8
    $region17: #{tpu_custom_call.1} parent=1 // pred_fallthru
      _
    // Predicated region
    $region18: #{tpu_custom_call.1} parent=1 // pred_check
      _
    $region19: #{tpu_custom_call.1} parent=1 // pred_check_branch
      %64 = sbr.rel (0) target = $region21
    $region20: #{tpu_custom_call.1} parent=1 // pred_region
      %s66 = ssub.s32 2048, 2048
      %67 = vsyncadd [#allocation9], %s66
      %s68 = sshll.u32 [#allocation10], 4
      %s69 = int_to_ptr.vmem [resolvable:$true] %s68
      %74 = dma.hbm_to_vmem [thread:$0]  %s4, 2048, %s69, [#allocation9], 128, 128, 8
    $region21: #{tpu_custom_call.1} parent=1 // pred_fallthru
      _
    // Predicated region
    $region22: #{tpu_custom_call.1} parent=1 // pred_check
      _
    $region23: #{tpu_custom_call.1} parent=1 // pred_check_branch
      %76 = sbr.rel (0) target = $region25
    $region24: #{tpu_custom_call.1} parent=1 // pred_region
      %s78 = ssub.s32 2048, 2048
      %79 = vsyncadd [#allocation12], %s78
      %s80 = sshll.u32 [#allocation11], 4
      %s81 = int_to_ptr.vmem [resolvable:$true] %s80
      %86 = dma.hbm_to_vmem [thread:$0]  %s5, 2048, %s81, [#allocation12], 128, 128, 8
    $region25: #{tpu_custom_call.1} parent=1 // pred_fallthru
      _
    // Predicated region
    $region26: #{tpu_custom_call.1} parent=1 // pred_check
      _
    $region27: #{tpu_custom_call.1} parent=1 // pred_check_branch
      %88 = sbr.rel (0) target = $region29
    $region28: #{tpu_custom_call.1} parent=1 // pred_region
      _
    $region29: #{tpu_custom_call.1} parent=1 // pred_fallthru
      _
    // Predicated region
    $region30: #{tpu_custom_call.1} parent=1 // pred_check
      _
    $region31: #{tpu_custom_call.1} parent=1 // pred_check_branch
      %90 = sbr.rel (0) target = $region33
    $region32: #{tpu_custom_call.1} parent=1 // pred_region
      %91 = dma.done [#allocation3], 32768
    $region33: #{tpu_custom_call.1} parent=1 // pred_fallthru
      _
    // Predicated region
    $region34: #{tpu_custom_call.1} parent=1 // pred_check
      _
    $region35: #{tpu_custom_call.1} parent=1 // pred_check_branch
      %93 = sbr.rel (0) target = $region37
    $region36: #{tpu_custom_call.1} parent=1 // pred_region
      %94 = dma.done [#allocation6], 512
    $region37: #{tpu_custom_call.1} parent=1 // pred_fallthru
      _
    // Predicated region
    $region38: #{tpu_custom_call.1} parent=1 // pred_check
      _
    $region39: #{tpu_custom_call.1} parent=1 // pred_check_branch
      %96 = sbr.rel (0) target = $region41
    $region40: #{tpu_custom_call.1} parent=1 // pred_region
      %97 = dma.done [#allocation6], 4096
    $region41: #{tpu_custom_call.1} parent=1 // pred_fallthru
      _
    // Predicated region
    $region42: #{tpu_custom_call.1} parent=1 // pred_check
      _
    $region43: #{tpu_custom_call.1} parent=1 // pred_check_branch
      %99 = sbr.rel (0) target = $region45
    $region44: #{tpu_custom_call.1} parent=1 // pred_region
      %100 = dma.done [#allocation9], 16384
    $region45: #{tpu_custom_call.1} parent=1 // pred_fallthru
      _
    // Predicated region
    $region46: #{tpu_custom_call.1} parent=1 // pred_check
      _
    $region47: #{tpu_custom_call.1} parent=1 // pred_check_branch
      %102 = sbr.rel (0) target = $region49
    $region48: #{tpu_custom_call.1} parent=1 // pred_region
      %103 = dma.done [#allocation9], 2048
    $region49: #{tpu_custom_call.1} parent=1 // pred_fallthru
      _
    // Predicated region
    $region50: #{tpu_custom_call.1} parent=1 // pred_check
      _
    $region51: #{tpu_custom_call.1} parent=1 // pred_check_branch
      %105 = sbr.rel (0) target = $region53
    $region52: #{tpu_custom_call.1} parent=1 // pred_region
      %106 = dma.done [#allocation12], 2048
    $region53: #{tpu_custom_call.1} parent=1 // pred_fallthru
      _
    %v107 = vld [vmem:[#allocation2] sm:$0xff]
    %v108 = vld [vmem:[#allocation2 + $0x8] sm:$0xff]
    %v109 = vld [vmem:[#allocation2 + $0x10] sm:$0xff]
    %v110 = vld [vmem:[#allocation2 + $0x18] sm:$0xff]
    %v111 = vld [vmem:[#allocation2 + $0x20] sm:$0xff]
    %v112 = vld [vmem:[#allocation2 + $0x28] sm:$0xff]
    %v113 = vld [vmem:[#allocation2 + $0x30] sm:$0xff]
    %v114 = vld [vmem:[#allocation2 + $0x38] sm:$0xff]
    %v115 = vld [vmem:[#allocation2 + $0x40] sm:$0xff]
    %v116 = vld [vmem:[#allocation2 + $0x48] sm:$0xff]
    %v117 = vld [vmem:[#allocation2 + $0x50] sm:$0xff]
    %v118 = vld [vmem:[#allocation2 + $0x58] sm:$0xff]
    %v119 = vld [vmem:[#allocation2 + $0x60] sm:$0xff]
    %v120 = vld [vmem:[#allocation2 + $0x68] sm:$0xff]
    %v121 = vld [vmem:[#allocation2 + $0x70] sm:$0xff]
    %v122 = vld [vmem:[#allocation2 + $0x78] sm:$0xff]
    %v123 = vld [vmem:[#allocation2 + $0x80] sm:$0xff]
    %v124 = vld [vmem:[#allocation2 + $0x88] sm:$0xff]
    %v125 = vld [vmem:[#allocation2 + $0x90] sm:$0xff]
    %v126 = vld [vmem:[#allocation2 + $0x98] sm:$0xff]
    %v127 = vld [vmem:[#allocation2 + $0xa0] sm:$0xff]
    %v128 = vld [vmem:[#allocation2 + $0xa8] sm:$0xff]
    %v129 = vld [vmem:[#allocation2 + $0xb0] sm:$0xff]
    %v130 = vld [vmem:[#allocation2 + $0xb8] sm:$0xff]
    %v131 = vld [vmem:[#allocation2 + $0xc0] sm:$0xff]
    %v132 = vld [vmem:[#allocation2 + $0xc8] sm:$0xff]
    %v133 = vld [vmem:[#allocation2 + $0xd0] sm:$0xff]
    %v134 = vld [vmem:[#allocation2 + $0xd8] sm:$0xff]
    %v135 = vld [vmem:[#allocation2 + $0xe0] sm:$0xff]
    %v136 = vld [vmem:[#allocation2 + $0xe8] sm:$0xff]
    %v137 = vld [vmem:[#allocation2 + $0xf0] sm:$0xff]
    %v138 = vld [vmem:[#allocation2 + $0xf8] sm:$0xff]
    %v139 = vld [vmem:[#allocation2 + $0x100] sm:$0xff]
    %v140 = vld [vmem:[#allocation2 + $0x108] sm:$0xff]
    %v141 = vld [vmem:[#allocation2 + $0x110] sm:$0xff]
    %v142 = vld [vmem:[#allocation2 + $0x118] sm:$0xff]
    %v143 = vld [vmem:[#allocation2 + $0x120] sm:$0xff]
    %v144 = vld [vmem:[#allocation2 + $0x128] sm:$0xff]
    %v145 = vld [vmem:[#allocation2 + $0x130] sm:$0xff]
    %v146 = vld [vmem:[#allocation2 + $0x138] sm:$0xff]
    %v147 = vld [vmem:[#allocation2 + $0x140] sm:$0xff]
    %v148 = vld [vmem:[#allocation2 + $0x148] sm:$0xff]
    %v149 = vld [vmem:[#allocation2 + $0x150] sm:$0xff]
    %v150 = vld [vmem:[#allocation2 + $0x158] sm:$0xff]
    %v151 = vld [vmem:[#allocation2 + $0x160] sm:$0xff]
    %v152 = vld [vmem:[#allocation2 + $0x168] sm:$0xff]
    %v153 = vld [vmem:[#allocation2 + $0x170] sm:$0xff]
    %v154 = vld [vmem:[#allocation2 + $0x178] sm:$0xff]
    %v155 = vld [vmem:[#allocation2 + $0x180] sm:$0xff]
    %v156 = vld [vmem:[#allocation2 + $0x188] sm:$0xff]
    %v157 = vld [vmem:[#allocation2 + $0x190] sm:$0xff]
    %v158 = vld [vmem:[#allocation2 + $0x198] sm:$0xff]
    %v159 = vld [vmem:[#allocation2 + $0x1a0] sm:$0xff]
    %v160 = vld [vmem:[#allocation2 + $0x1a8] sm:$0xff]
    %v161 = vld [vmem:[#allocation2 + $0x1b0] sm:$0xff]
    %v162 = vld [vmem:[#allocation2 + $0x1b8] sm:$0xff]
    %v163 = vld [vmem:[#allocation2 + $0x1c0] sm:$0xff]
    %v164 = vld [vmem:[#allocation2 + $0x1c8] sm:$0xff]
    %v165 = vld [vmem:[#allocation2 + $0x1d0] sm:$0xff]
    %v166 = vld [vmem:[#allocation2 + $0x1d8] sm:$0xff]
    %v167 = vld [vmem:[#allocation2 + $0x1e0] sm:$0xff]
    %v168 = vld [vmem:[#allocation2 + $0x1e8] sm:$0xff]
    %v169 = vld [vmem:[#allocation2 + $0x1f0] sm:$0xff]
    %v170 = vld [vmem:[#allocation2 + $0x1f8] sm:$0xff]
    %v171 = vld [vmem:[#allocation2 + $0x200] sm:$0xff]
    %v172 = vld [vmem:[#allocation2 + $0x208] sm:$0xff]
    %v173 = vld [vmem:[#allocation2 + $0x210] sm:$0xff]
    %v174 = vld [vmem:[#allocation2 + $0x218] sm:$0xff]
    %v175 = vld [vmem:[#allocation2 + $0x220] sm:$0xff]
    %v176 = vld [vmem:[#allocation2 + $0x228] sm:$0xff]
    %v177 = vld [vmem:[#allocation2 + $0x230] sm:$0xff]
    %v178 = vld [vmem:[#allocation2 + $0x238] sm:$0xff]
    %v179 = vld [vmem:[#allocation2 + $0x240] sm:$0xff]
    %v180 = vld [vmem:[#allocation2 + $0x248] sm:$0xff]
    %v181 = vld [vmem:[#allocation2 + $0x250] sm:$0xff]
    %v182 = vld [vmem:[#allocation2 + $0x258] sm:$0xff]
    %v183 = vld [vmem:[#allocation2 + $0x260] sm:$0xff]
    %v184 = vld [vmem:[#allocation2 + $0x268] sm:$0xff]
    %v185 = vld [vmem:[#allocation2 + $0x270] sm:$0xff]
    %v186 = vld [vmem:[#allocation2 + $0x278] sm:$0xff]
    %v187 = vld [vmem:[#allocation2 + $0x280] sm:$0xff]
    %v188 = vld [vmem:[#allocation2 + $0x288] sm:$0xff]
    %v189 = vld [vmem:[#allocation2 + $0x290] sm:$0xff]
    %v190 = vld [vmem:[#allocation2 + $0x298] sm:$0xff]
    %v191 = vld [vmem:[#allocation2 + $0x2a0] sm:$0xff]
    %v192 = vld [vmem:[#allocation2 + $0x2a8] sm:$0xff]
    %v193 = vld [vmem:[#allocation2 + $0x2b0] sm:$0xff]
    %v194 = vld [vmem:[#allocation2 + $0x2b8] sm:$0xff]
    %v195 = vld [vmem:[#allocation2 + $0x2c0] sm:$0xff]
    %v196 = vld [vmem:[#allocation2 + $0x2c8] sm:$0xff]
    %v197 = vld [vmem:[#allocation2 + $0x2d0] sm:$0xff]
    %v198 = vld [vmem:[#allocation2 + $0x2d8] sm:$0xff]
    %v199 = vld [vmem:[#allocation2 + $0x2e0] sm:$0xff]
    %v200 = vld [vmem:[#allocation2 + $0x2e8] sm:$0xff]
    %v201 = vld [vmem:[#allocation2 + $0x2f0] sm:$0xff]
    %v202 = vld [vmem:[#allocation2 + $0x2f8] sm:$0xff]
    %v203 = vld [vmem:[#allocation2 + $0x300] sm:$0xff]
    %v204 = vld [vmem:[#allocation2 + $0x308] sm:$0xff]
    %v205 = vld [vmem:[#allocation2 + $0x310] sm:$0xff]
    %v206 = vld [vmem:[#allocation2 + $0x318] sm:$0xff]
    %v207 = vld [vmem:[#allocation2 + $0x320] sm:$0xff]
    %v208 = vld [vmem:[#allocation2 + $0x328] sm:$0xff]
    %v209 = vld [vmem:[#allocation2 + $0x330] sm:$0xff]
    %v210 = vld [vmem:[#allocation2 + $0x338] sm:$0xff]
    %v211 = vld [vmem:[#allocation2 + $0x340] sm:$0xff]
    %v212 = vld [vmem:[#allocation2 + $0x348] sm:$0xff]
    %v213 = vld [vmem:[#allocation2 + $0x350] sm:$0xff]
    %v214 = vld [vmem:[#allocation2 + $0x358] sm:$0xff]
    %v215 = vld [vmem:[#allocation2 + $0x360] sm:$0xff]
    %v216 = vld [vmem:[#allocation2 + $0x368] sm:$0xff]
    %v217 = vld [vmem:[#allocation2 + $0x370] sm:$0xff]
    %v218 = vld [vmem:[#allocation2 + $0x378] sm:$0xff]
    %v219 = vld [vmem:[#allocation2 + $0x380] sm:$0xff]
    %v220 = vld [vmem:[#allocation2 + $0x388] sm:$0xff]
    %v221 = vld [vmem:[#allocation2 + $0x390] sm:$0xff]
    %v222 = vld [vmem:[#allocation2 + $0x398] sm:$0xff]
    %v223 = vld [vmem:[#allocation2 + $0x3a0] sm:$0xff]
    %v224 = vld [vmem:[#allocation2 + $0x3a8] sm:$0xff]
    %v225 = vld [vmem:[#allocation2 + $0x3b0] sm:$0xff]
    %v226 = vld [vmem:[#allocation2 + $0x3b8] sm:$0xff]
    %v227 = vld [vmem:[#allocation2 + $0x3c0] sm:$0xff]
    %v228 = vld [vmem:[#allocation2 + $0x3c8] sm:$0xff]
    %v229 = vld [vmem:[#allocation2 + $0x3d0] sm:$0xff]
    %v230 = vld [vmem:[#allocation2 + $0x3d8] sm:$0xff]
    %v231 = vld [vmem:[#allocation2 + $0x3e0] sm:$0xff]
    %v232 = vld [vmem:[#allocation2 + $0x3e8] sm:$0xff]
    %v233 = vld [vmem:[#allocation2 + $0x3f0] sm:$0xff]
    %v234 = vld [vmem:[#allocation2 + $0x3f8] sm:$0xff]
    %v235 = vld [vmem:[#allocation2 + $0x400] sm:$0xff]
    %v236 = vld [vmem:[#allocation2 + $0x408] sm:$0xff]
    %v237 = vld [vmem:[#allocation2 + $0x410] sm:$0xff]
    %v238 = vld [vmem:[#allocation2 + $0x418] sm:$0xff]
    %v239 = vld [vmem:[#allocation2 + $0x420] sm:$0xff]
    %v240 = vld [vmem:[#allocation2 + $0x428] sm:$0xff]
    %v241 = vld [vmem:[#allocation2 + $0x430] sm:$0xff]
    %v242 = vld [vmem:[#allocation2 + $0x438] sm:$0xff]
    %v243 = vld [vmem:[#allocation2 + $0x440] sm:$0xff]
    %v244 = vld [vmem:[#allocation2 + $0x448] sm:$0xff]
    %v245 = vld [vmem:[#allocation2 + $0x450] sm:$0xff]
    %v246 = vld [vmem:[#allocation2 + $0x458] sm:$0xff]
    %v247 = vld [vmem:[#allocation2 + $0x460] sm:$0xff]
    %v248 = vld [vmem:[#allocation2 + $0x468] sm:$0xff]
    %v249 = vld [vmem:[#allocation2 + $0x470] sm:$0xff]
    %v250 = vld [vmem:[#allocation2 + $0x478] sm:$0xff]
    %v251 = vld [vmem:[#allocation2 + $0x480] sm:$0xff]
    %v252 = vld [vmem:[#allocation2 + $0x488] sm:$0xff]
    %v253 = vld [vmem:[#allocation2 + $0x490] sm:$0xff]
    %v254 = vld [vmem:[#allocation2 + $0x498] sm:$0xff]
    %v255 = vld [vmem:[#allocation2 + $0x4a0] sm:$0xff]
    %v256 = vld [vmem:[#allocation2 + $0x4a8] sm:$0xff]
    %v257 = vld [vmem:[#allocation2 + $0x4b0] sm:$0xff]
    %v258 = vld [vmem:[#allocation2 + $0x4b8] sm:$0xff]
    %v259 = vld [vmem:[#allocation2 + $0x4c0] sm:$0xff]
    %v260 = vld [vmem:[#allocation2 + $0x4c8] sm:$0xff]
    %v261 = vld [vmem:[#allocation2 + $0x4d0] sm:$0xff]
    %v262 = vld [vmem:[#allocation2 + $0x4d8] sm:$0xff]
    %v263 = vld [vmem:[#allocation2 + $0x4e0] sm:$0xff]
    %v264 = vld [vmem:[#allocation2 + $0x4e8] sm:$0xff]
    %v265 = vld [vmem:[#allocation2 + $0x4f0] sm:$0xff]
    %v266 = vld [vmem:[#allocation2 + $0x4f8] sm:$0xff]
    %v267 = vld [vmem:[#allocation2 + $0x500] sm:$0xff]
    %v268 = vld [vmem:[#allocation2 + $0x508] sm:$0xff]
    %v269 = vld [vmem:[#allocation2 + $0x510] sm:$0xff]
    %v270 = vld [vmem:[#allocation2 + $0x518] sm:$0xff]
    %v271 = vld [vmem:[#allocation2 + $0x520] sm:$0xff]
    %v272 = vld [vmem:[#allocation2 + $0x528] sm:$0xff]
    %v273 = vld [vmem:[#allocation2 + $0x530] sm:$0xff]
    %v274 = vld [vmem:[#allocation2 + $0x538] sm:$0xff]
    %v275 = vld [vmem:[#allocation2 + $0x540] sm:$0xff]
    %v276 = vld [vmem:[#allocation2 + $0x548] sm:$0xff]
    %v277 = vld [vmem:[#allocation2 + $0x550] sm:$0xff]
    %v278 = vld [vmem:[#allocation2 + $0x558] sm:$0xff]
    %v279 = vld [vmem:[#allocation2 + $0x560] sm:$0xff]
    %v280 = vld [vmem:[#allocation2 + $0x568] sm:$0xff]
    %v281 = vld [vmem:[#allocation2 + $0x570] sm:$0xff]
    %v282 = vld [vmem:[#allocation2 + $0x578] sm:$0xff]
    %v283 = vld [vmem:[#allocation2 + $0x580] sm:$0xff]
    %v284 = vld [vmem:[#allocation2 + $0x588] sm:$0xff]
    %v285 = vld [vmem:[#allocation2 + $0x590] sm:$0xff]
    %v286 = vld [vmem:[#allocation2 + $0x598] sm:$0xff]
    %v287 = vld [vmem:[#allocation2 + $0x5a0] sm:$0xff]
    %v288 = vld [vmem:[#allocation2 + $0x5a8] sm:$0xff]
    %v289 = vld [vmem:[#allocation2 + $0x5b0] sm:$0xff]
    %v290 = vld [vmem:[#allocation2 + $0x5b8] sm:$0xff]
    %v291 = vld [vmem:[#allocation2 + $0x5c0] sm:$0xff]
    %v292 = vld [vmem:[#allocation2 + $0x5c8] sm:$0xff]
    %v293 = vld [vmem:[#allocation2 + $0x5d0] sm:$0xff]
    %v294 = vld [vmem:[#allocation2 + $0x5d8] sm:$0xff]
    %v295 = vld [vmem:[#allocation2 + $0x5e0] sm:$0xff]
    %v296 = vld [vmem:[#allocation2 + $0x5e8] sm:$0xff]
    %v297 = vld [vmem:[#allocation2 + $0x5f0] sm:$0xff]
    %v298 = vld [vmem:[#allocation2 + $0x5f8] sm:$0xff]
    %v299 = vld [vmem:[#allocation2 + $0x600] sm:$0xff]
    %v300 = vld [vmem:[#allocation2 + $0x608] sm:$0xff]
    %v301 = vld [vmem:[#allocation2 + $0x610] sm:$0xff]
    %v302 = vld [vmem:[#allocation2 + $0x618] sm:$0xff]
    %v303 = vld [vmem:[#allocation2 + $0x620] sm:$0xff]
    %v304 = vld [vmem:[#allocation2 + $0x628] sm:$0xff]
    %v305 = vld [vmem:[#allocation2 + $0x630] sm:$0xff]
    %v306 = vld [vmem:[#allocation2 + $0x638] sm:$0xff]
    %v307 = vld [vmem:[#allocation2 + $0x640] sm:$0xff]
    %v308 = vld [vmem:[#allocation2 + $0x648] sm:$0xff]
    %v309 = vld [vmem:[#allocation2 + $0x650] sm:$0xff]
    %v310 = vld [vmem:[#allocation2 + $0x658] sm:$0xff]
    %v311 = vld [vmem:[#allocation2 + $0x660] sm:$0xff]
    %v312 = vld [vmem:[#allocation2 + $0x668] sm:$0xff]
    %v313 = vld [vmem:[#allocation2 + $0x670] sm:$0xff]
    %v314 = vld [vmem:[#allocation2 + $0x678] sm:$0xff]
    %v315 = vld [vmem:[#allocation2 + $0x680] sm:$0xff]
    %v316 = vld [vmem:[#allocation2 + $0x688] sm:$0xff]
    %v317 = vld [vmem:[#allocation2 + $0x690] sm:$0xff]
    %v318 = vld [vmem:[#allocation2 + $0x698] sm:$0xff]
    %v319 = vld [vmem:[#allocation2 + $0x6a0] sm:$0xff]
    %v320 = vld [vmem:[#allocation2 + $0x6a8] sm:$0xff]
    %v321 = vld [vmem:[#allocation2 + $0x6b0] sm:$0xff]
    %v322 = vld [vmem:[#allocation2 + $0x6b8] sm:$0xff]
    %v323 = vld [vmem:[#allocation2 + $0x6c0] sm:$0xff]
    %v324 = vld [vmem:[#allocation2 + $0x6c8] sm:$0xff]
    %v325 = vld [vmem:[#allocation2 + $0x6d0] sm:$0xff]
    %v326 = vld [vmem:[#allocation2 + $0x6d8] sm:$0xff]
    %v327 = vld [vmem:[#allocation2 + $0x6e0] sm:$0xff]
    %v328 = vld [vmem:[#allocation2 + $0x6e8] sm:$0xff]
    %v329 = vld [vmem:[#allocation2 + $0x6f0] sm:$0xff]
    %v330 = vld [vmem:[#allocation2 + $0x6f8] sm:$0xff]
    %v331 = vld [vmem:[#allocation2 + $0x700] sm:$0xff]
    %v332 = vld [vmem:[#allocation2 + $0x708] sm:$0xff]
    %v333 = vld [vmem:[#allocation2 + $0x710] sm:$0xff]
    %v334 = vld [vmem:[#allocation2 + $0x718] sm:$0xff]
    %v335 = vld [vmem:[#allocation2 + $0x720] sm:$0xff]
    %v336 = vld [vmem:[#allocation2 + $0x728] sm:$0xff]
    %v337 = vld [vmem:[#allocation2 + $0x730] sm:$0xff]
    %v338 = vld [vmem:[#allocation2 + $0x738] sm:$0xff]
    %v339 = vld [vmem:[#allocation2 + $0x740] sm:$0xff]
    %v340 = vld [vmem:[#allocation2 + $0x748] sm:$0xff]
    %v341 = vld [vmem:[#allocation2 + $0x750] sm:$0xff]
    %v342 = vld [vmem:[#allocation2 + $0x758] sm:$0xff]
    %v343 = vld [vmem:[#allocation2 + $0x760] sm:$0xff]
    %v344 = vld [vmem:[#allocation2 + $0x768] sm:$0xff]
    %v345 = vld [vmem:[#allocation2 + $0x770] sm:$0xff]
    %v346 = vld [vmem:[#allocation2 + $0x778] sm:$0xff]
    %v347 = vld [vmem:[#allocation2 + $0x780] sm:$0xff]
    %v348 = vld [vmem:[#allocation2 + $0x788] sm:$0xff]
    %v349 = vld [vmem:[#allocation2 + $0x790] sm:$0xff]
    %v350 = vld [vmem:[#allocation2 + $0x798] sm:$0xff]
    %v351 = vld [vmem:[#allocation2 + $0x7a0] sm:$0xff]
    %v352 = vld [vmem:[#allocation2 + $0x7a8] sm:$0xff]
    %v353 = vld [vmem:[#allocation2 + $0x7b0] sm:$0xff]
    %v354 = vld [vmem:[#allocation2 + $0x7b8] sm:$0xff]
    %v355 = vld [vmem:[#allocation2 + $0x7c0] sm:$0xff]
    %v356 = vld [vmem:[#allocation2 + $0x7c8] sm:$0xff]
    %v357 = vld [vmem:[#allocation2 + $0x7d0] sm:$0xff]
    %v358 = vld [vmem:[#allocation2 + $0x7d8] sm:$0xff]
    %v359 = vld [vmem:[#allocation2 + $0x7e0] sm:$0xff]
    %v360 = vld [vmem:[#allocation2 + $0x7e8] sm:$0xff]
    %v361 = vld [vmem:[#allocation2 + $0x7f0] sm:$0xff]
    %v362 = vld [vmem:[#allocation2 + $0x7f8] sm:$0xff]
    %v363 = vunpack.c.l.bf16 %v107
    %v364 = vunpack.c.h.bf16 %v107
    %v365 = vunpack.c.l.bf16 %v108
    %v366 = vunpack.c.h.bf16 %v108
    %v367 = vunpack.c.l.bf16 %v109
    %v368 = vunpack.c.h.bf16 %v109
    %v369 = vunpack.c.l.bf16 %v110
    %v370 = vunpack.c.h.bf16 %v110
    %v371 = vunpack.c.l.bf16 %v111
    %v372 = vunpack.c.h.bf16 %v111
    %v373 = vunpack.c.l.bf16 %v112
    %v374 = vunpack.c.h.bf16 %v112
    %v375 = vunpack.c.l.bf16 %v113
    %v376 = vunpack.c.h.bf16 %v113
    %v377 = vunpack.c.l.bf16 %v114
    %v378 = vunpack.c.h.bf16 %v114
    %v379 = vunpack.c.l.bf16 %v115
    %v380 = vunpack.c.h.bf16 %v115
    %v381 = vunpack.c.l.bf16 %v116
    %v382 = vunpack.c.h.bf16 %v116
    %v383 = vunpack.c.l.bf16 %v117
    %v384 = vunpack.c.h.bf16 %v117
    %v385 = vunpack.c.l.bf16 %v118
    %v386 = vunpack.c.h.bf16 %v118
    %v387 = vunpack.c.l.bf16 %v119
    %v388 = vunpack.c.h.bf16 %v119
    %v389 = vunpack.c.l.bf16 %v120
    %v390 = vunpack.c.h.bf16 %v120
    %v391 = vunpack.c.l.bf16 %v121
    %v392 = vunpack.c.h.bf16 %v121
    %v393 = vunpack.c.l.bf16 %v122
    %v394 = vunpack.c.h.bf16 %v122
    %v395 = vunpack.c.l.bf16 %v123
    %v396 = vunpack.c.h.bf16 %v123
    %v397 = vunpack.c.l.bf16 %v124
    %v398 = vunpack.c.h.bf16 %v124
    %v399 = vunpack.c.l.bf16 %v125
    %v400 = vunpack.c.h.bf16 %v125
    %v401 = vunpack.c.l.bf16 %v126
    %v402 = vunpack.c.h.bf16 %v126
    %v403 = vunpack.c.l.bf16 %v127
    %v404 = vunpack.c.h.bf16 %v127
    %v405 = vunpack.c.l.bf16 %v128
    %v406 = vunpack.c.h.bf16 %v128
    %v407 = vunpack.c.l.bf16 %v129
    %v408 = vunpack.c.h.bf16 %v129
    %v409 = vunpack.c.l.bf16 %v130
    %v410 = vunpack.c.h.bf16 %v130
    %v411 = vunpack.c.l.bf16 %v131
    %v412 = vunpack.c.h.bf16 %v131
    %v413 = vunpack.c.l.bf16 %v132
    %v414 = vunpack.c.h.bf16 %v132
    %v415 = vunpack.c.l.bf16 %v133
    %v416 = vunpack.c.h.bf16 %v133
    %v417 = vunpack.c.l.bf16 %v134
    %v418 = vunpack.c.h.bf16 %v134
    %v419 = vunpack.c.l.bf16 %v135
    %v420 = vunpack.c.h.bf16 %v135
    %v421 = vunpack.c.l.bf16 %v136
    %v422 = vunpack.c.h.bf16 %v136
    %v423 = vunpack.c.l.bf16 %v137
    %v424 = vunpack.c.h.bf16 %v137
    %v425 = vunpack.c.l.bf16 %v138
    %v426 = vunpack.c.h.bf16 %v138
    %v427 = vunpack.c.l.bf16 %v139
    %v428 = vunpack.c.h.bf16 %v139
    %v429 = vunpack.c.l.bf16 %v140
    %v430 = vunpack.c.h.bf16 %v140
    %v431 = vunpack.c.l.bf16 %v141
    %v432 = vunpack.c.h.bf16 %v141
    %v433 = vunpack.c.l.bf16 %v142
    %v434 = vunpack.c.h.bf16 %v142
    %v435 = vunpack.c.l.bf16 %v143
    %v436 = vunpack.c.h.bf16 %v143
    %v437 = vunpack.c.l.bf16 %v144
    %v438 = vunpack.c.h.bf16 %v144
    %v439 = vunpack.c.l.bf16 %v145
    %v440 = vunpack.c.h.bf16 %v145
    %v441 = vunpack.c.l.bf16 %v146
    %v442 = vunpack.c.h.bf16 %v146
    %v443 = vunpack.c.l.bf16 %v147
    %v444 = vunpack.c.h.bf16 %v147
    %v445 = vunpack.c.l.bf16 %v148
    %v446 = vunpack.c.h.bf16 %v148
    %v447 = vunpack.c.l.bf16 %v149
    %v448 = vunpack.c.h.bf16 %v149
    %v449 = vunpack.c.l.bf16 %v150
    %v450 = vunpack.c.h.bf16 %v150
    %v451 = vunpack.c.l.bf16 %v151
    %v452 = vunpack.c.h.bf16 %v151
    %v453 = vunpack.c.l.bf16 %v152
    %v454 = vunpack.c.h.bf16 %v152
    %v455 = vunpack.c.l.bf16 %v153
    %v456 = vunpack.c.h.bf16 %v153
    %v457 = vunpack.c.l.bf16 %v154
    %v458 = vunpack.c.h.bf16 %v154
    %v459 = vunpack.c.l.bf16 %v155
    %v460 = vunpack.c.h.bf16 %v155
    %v461 = vunpack.c.l.bf16 %v156
    %v462 = vunpack.c.h.bf16 %v156
    %v463 = vunpack.c.l.bf16 %v157
    %v464 = vunpack.c.h.bf16 %v157
    %v465 = vunpack.c.l.bf16 %v158
    %v466 = vunpack.c.h.bf16 %v158
    %v467 = vunpack.c.l.bf16 %v159
    %v468 = vunpack.c.h.bf16 %v159
    %v469 = vunpack.c.l.bf16 %v160
    %v470 = vunpack.c.h.bf16 %v160
    %v471 = vunpack.c.l.bf16 %v161
    %v472 = vunpack.c.h.bf16 %v161
    %v473 = vunpack.c.l.bf16 %v162
    %v474 = vunpack.c.h.bf16 %v162
    %v475 = vunpack.c.l.bf16 %v163
    %v476 = vunpack.c.h.bf16 %v163
    %v477 = vunpack.c.l.bf16 %v164
    %v478 = vunpack.c.h.bf16 %v164
    %v479 = vunpack.c.l.bf16 %v165
    %v480 = vunpack.c.h.bf16 %v165
    %v481 = vunpack.c.l.bf16 %v166
    %v482 = vunpack.c.h.bf16 %v166
    %v483 = vunpack.c.l.bf16 %v167
    %v484 = vunpack.c.h.bf16 %v167
    %v485 = vunpack.c.l.bf16 %v168
    %v486 = vunpack.c.h.bf16 %v168
    %v487 = vunpack.c.l.bf16 %v169
    %v488 = vunpack.c.h.bf16 %v169
    %v489 = vunpack.c.l.bf16 %v170
    %v490 = vunpack.c.h.bf16 %v170
    %v491 = vunpack.c.l.bf16 %v171
    %v492 = vunpack.c.h.bf16 %v171
    %v493 = vunpack.c.l.bf16 %v172
    %v494 = vunpack.c.h.bf16 %v172
    %v495 = vunpack.c.l.bf16 %v173
    %v496 = vunpack.c.h.bf16 %v173
    %v497 = vunpack.c.l.bf16 %v174
    %v498 = vunpack.c.h.bf16 %v174
    %v499 = vunpack.c.l.bf16 %v175
    %v500 = vunpack.c.h.bf16 %v175
    %v501 = vunpack.c.l.bf16 %v176
    %v502 = vunpack.c.h.bf16 %v176
    %v503 = vunpack.c.l.bf16 %v177
    %v504 = vunpack.c.h.bf16 %v177
    %v505 = vunpack.c.l.bf16 %v178
    %v506 = vunpack.c.h.bf16 %v178
    %v507 = vunpack.c.l.bf16 %v179
    %v508 = vunpack.c.h.bf16 %v179
    %v509 = vunpack.c.l.bf16 %v180
    %v510 = vunpack.c.h.bf16 %v180
    %v511 = vunpack.c.l.bf16 %v181
    %v512 = vunpack.c.h.bf16 %v181
    %v513 = vunpack.c.l.bf16 %v182
    %v514 = vunpack.c.h.bf16 %v182
    %v515 = vunpack.c.l.bf16 %v183
    %v516 = vunpack.c.h.bf16 %v183
    %v517 = vunpack.c.l.bf16 %v184
    %v518 = vunpack.c.h.bf16 %v184
    %v519 = vunpack.c.l.bf16 %v185
    %v520 = vunpack.c.h.bf16 %v185
    %v521 = vunpack.c.l.bf16 %v186
    %v522 = vunpack.c.h.bf16 %v186
    %v523 = vunpack.c.l.bf16 %v187
    %v524 = vunpack.c.h.bf16 %v187
    %v525 = vunpack.c.l.bf16 %v188
    %v526 = vunpack.c.h.bf16 %v188
    %v527 = vunpack.c.l.bf16 %v189
    %v528 = vunpack.c.h.bf16 %v189
    %v529 = vunpack.c.l.bf16 %v190
    %v530 = vunpack.c.h.bf16 %v190
    %v531 = vunpack.c.l.bf16 %v191
    %v532 = vunpack.c.h.bf16 %v191
    %v533 = vunpack.c.l.bf16 %v192
    %v534 = vunpack.c.h.bf16 %v192
    %v535 = vunpack.c.l.bf16 %v193
    %v536 = vunpack.c.h.bf16 %v193
    %v537 = vunpack.c.l.bf16 %v194
    %v538 = vunpack.c.h.bf16 %v194
    %v539 = vunpack.c.l.bf16 %v195
    %v540 = vunpack.c.h.bf16 %v195
    %v541 = vunpack.c.l.bf16 %v196
    %v542 = vunpack.c.h.bf16 %v196
    %v543 = vunpack.c.l.bf16 %v197
    %v544 = vunpack.c.h.bf16 %v197
    %v545 = vunpack.c.l.bf16 %v198
    %v546 = vunpack.c.h.bf16 %v198
    %v547 = vunpack.c.l.bf16 %v199
    %v548 = vunpack.c.h.bf16 %v199
    %v549 = vunpack.c.l.bf16 %v200
    %v550 = vunpack.c.h.bf16 %v200
    %v551 = vunpack.c.l.bf16 %v201
    %v552 = vunpack.c.h.bf16 %v201
    %v553 = vunpack.c.l.bf16 %v202
    %v554 = vunpack.c.h.bf16 %v202
    %v555 = vunpack.c.l.bf16 %v203
    %v556 = vunpack.c.h.bf16 %v203
    %v557 = vunpack.c.l.bf16 %v204
    %v558 = vunpack.c.h.bf16 %v204
    %v559 = vunpack.c.l.bf16 %v205
    %v560 = vunpack.c.h.bf16 %v205
    %v561 = vunpack.c.l.bf16 %v206
    %v562 = vunpack.c.h.bf16 %v206
    %v563 = vunpack.c.l.bf16 %v207
    %v564 = vunpack.c.h.bf16 %v207
    %v565 = vunpack.c.l.bf16 %v208
    %v566 = vunpack.c.h.bf16 %v208
    %v567 = vunpack.c.l.bf16 %v209
    %v568 = vunpack.c.h.bf16 %v209
    %v569 = vunpack.c.l.bf16 %v210
    %v570 = vunpack.c.h.bf16 %v210
    %v571 = vunpack.c.l.bf16 %v211
    %v572 = vunpack.c.h.bf16 %v211
    %v573 = vunpack.c.l.bf16 %v212
    %v574 = vunpack.c.h.bf16 %v212
    %v575 = vunpack.c.l.bf16 %v213
    %v576 = vunpack.c.h.bf16 %v213
    %v577 = vunpack.c.l.bf16 %v214
    %v578 = vunpack.c.h.bf16 %v214
    %v579 = vunpack.c.l.bf16 %v215
    %v580 = vunpack.c.h.bf16 %v215
    %v581 = vunpack.c.l.bf16 %v216
    %v582 = vunpack.c.h.bf16 %v216
    %v583 = vunpack.c.l.bf16 %v217
    %v584 = vunpack.c.h.bf16 %v217
    %v585 = vunpack.c.l.bf16 %v218
    %v586 = vunpack.c.h.bf16 %v218
    %v587 = vunpack.c.l.bf16 %v219
    %v588 = vunpack.c.h.bf16 %v219
    %v589 = vunpack.c.l.bf16 %v220
    %v590 = vunpack.c.h.bf16 %v220
    %v591 = vunpack.c.l.bf16 %v221
    %v592 = vunpack.c.h.bf16 %v221
    %v593 = vunpack.c.l.bf16 %v222
    %v594 = vunpack.c.h.bf16 %v222
    %v595 = vunpack.c.l.bf16 %v223
    %v596 = vunpack.c.h.bf16 %v223
    %v597 = vunpack.c.l.bf16 %v224
    %v598 = vunpack.c.h.bf16 %v224
    %v599 = vunpack.c.l.bf16 %v225
    %v600 = vunpack.c.h.bf16 %v225
    %v601 = vunpack.c.l.bf16 %v226
    %v602 = vunpack.c.h.bf16 %v226
    %v603 = vunpack.c.l.bf16 %v227
    %v604 = vunpack.c.h.bf16 %v227
    %v605 = vunpack.c.l.bf16 %v228
    %v606 = vunpack.c.h.bf16 %v228
    %v607 = vunpack.c.l.bf16 %v229
    %v608 = vunpack.c.h.bf16 %v229
    %v609 = vunpack.c.l.bf16 %v230
    %v610 = vunpack.c.h.bf16 %v230
    %v611 = vunpack.c.l.bf16 %v231
    %v612 = vunpack.c.h.bf16 %v231
    %v613 = vunpack.c.l.bf16 %v232
    %v614 = vunpack.c.h.bf16 %v232
    %v615 = vunpack.c.l.bf16 %v233
    %v616 = vunpack.c.h.bf16 %v233
    %v617 = vunpack.c.l.bf16 %v234
    %v618 = vunpack.c.h.bf16 %v234
    %v619 = vunpack.c.l.bf16 %v235
    %v620 = vunpack.c.h.bf16 %v235
    %v621 = vunpack.c.l.bf16 %v236
    %v622 = vunpack.c.h.bf16 %v236
    %v623 = vunpack.c.l.bf16 %v237
    %v624 = vunpack.c.h.bf16 %v237
    %v625 = vunpack.c.l.bf16 %v238
    %v626 = vunpack.c.h.bf16 %v238
    %v627 = vunpack.c.l.bf16 %v239
    %v628 = vunpack.c.h.bf16 %v239
    %v629 = vunpack.c.l.bf16 %v240
    %v630 = vunpack.c.h.bf16 %v240
    %v631 = vunpack.c.l.bf16 %v241
    %v632 = vunpack.c.h.bf16 %v241
    %v633 = vunpack.c.l.bf16 %v242
    %v634 = vunpack.c.h.bf16 %v242
    %v635 = vunpack.c.l.bf16 %v243
    %v636 = vunpack.c.h.bf16 %v243
    %v637 = vunpack.c.l.bf16 %v244
    %v638 = vunpack.c.h.bf16 %v244
    %v639 = vunpack.c.l.bf16 %v245
    %v640 = vunpack.c.h.bf16 %v245
    %v641 = vunpack.c.l.bf16 %v246
    %v642 = vunpack.c.h.bf16 %v246
    %v643 = vunpack.c.l.bf16 %v247
    %v644 = vunpack.c.h.bf16 %v247
    %v645 = vunpack.c.l.bf16 %v248
    %v646 = vunpack.c.h.bf16 %v248
    %v647 = vunpack.c.l.bf16 %v249
    %v648 = vunpack.c.h.bf16 %v249
    %v649 = vunpack.c.l.bf16 %v250
    %v650 = vunpack.c.h.bf16 %v250
    %v651 = vunpack.c.l.bf16 %v251
    %v652 = vunpack.c.h.bf16 %v251
    %v653 = vunpack.c.l.bf16 %v252
    %v654 = vunpack.c.h.bf16 %v252
    %v655 = vunpack.c.l.bf16 %v253
    %v656 = vunpack.c.h.bf16 %v253
    %v657 = vunpack.c.l.bf16 %v254
    %v658 = vunpack.c.h.bf16 %v254
    %v659 = vunpack.c.l.bf16 %v255
    %v660 = vunpack.c.h.bf16 %v255
    %v661 = vunpack.c.l.bf16 %v256
    %v662 = vunpack.c.h.bf16 %v256
    %v663 = vunpack.c.l.bf16 %v257
    %v664 = vunpack.c.h.bf16 %v257
    %v665 = vunpack.c.l.bf16 %v258
    %v666 = vunpack.c.h.bf16 %v258
    %v667 = vunpack.c.l.bf16 %v259
    %v668 = vunpack.c.h.bf16 %v259
    %v669 = vunpack.c.l.bf16 %v260
    %v670 = vunpack.c.h.bf16 %v260
    %v671 = vunpack.c.l.bf16 %v261
    %v672 = vunpack.c.h.bf16 %v261
    %v673 = vunpack.c.l.bf16 %v262
    %v674 = vunpack.c.h.bf16 %v262
    %v675 = vunpack.c.l.bf16 %v263
    %v676 = vunpack.c.h.bf16 %v263
    %v677 = vunpack.c.l.bf16 %v264
    %v678 = vunpack.c.h.bf16 %v264
    %v679 = vunpack.c.l.bf16 %v265
    %v680 = vunpack.c.h.bf16 %v265
    %v681 = vunpack.c.l.bf16 %v266
    %v682 = vunpack.c.h.bf16 %v266
    %v683 = vunpack.c.l.bf16 %v267
    %v684 = vunpack.c.h.bf16 %v267
    %v685 = vunpack.c.l.bf16 %v268
    %v686 = vunpack.c.h.bf16 %v268
    %v687 = vunpack.c.l.bf16 %v269
    %v688 = vunpack.c.h.bf16 %v269
    %v689 = vunpack.c.l.bf16 %v270
    %v690 = vunpack.c.h.bf16 %v270
    %v691 = vunpack.c.l.bf16 %v271
    %v692 = vunpack.c.h.bf16 %v271
    %v693 = vunpack.c.l.bf16 %v272
    %v694 = vunpack.c.h.bf16 %v272
    %v695 = vunpack.c.l.bf16 %v273
    %v696 = vunpack.c.h.bf16 %v273
    %v697 = vunpack.c.l.bf16 %v274
    %v698 = vunpack.c.h.bf16 %v274
    %v699 = vunpack.c.l.bf16 %v275
    %v700 = vunpack.c.h.bf16 %v275
    %v701 = vunpack.c.l.bf16 %v276
    %v702 = vunpack.c.h.bf16 %v276
    %v703 = vunpack.c.l.bf16 %v277
    %v704 = vunpack.c.h.bf16 %v277
    %v705 = vunpack.c.l.bf16 %v278
    %v706 = vunpack.c.h.bf16 %v278
    %v707 = vunpack.c.l.bf16 %v279
    %v708 = vunpack.c.h.bf16 %v279
    %v709 = vunpack.c.l.bf16 %v280
    %v710 = vunpack.c.h.bf16 %v280
    %v711 = vunpack.c.l.bf16 %v281
    %v712 = vunpack.c.h.bf16 %v281
    %v713 = vunpack.c.l.bf16 %v282
    %v714 = vunpack.c.h.bf16 %v282
    %v715 = vunpack.c.l.bf16 %v283
    %v716 = vunpack.c.h.bf16 %v283
    %v717 = vunpack.c.l.bf16 %v284
    %v718 = vunpack.c.h.bf16 %v284
    %v719 = vunpack.c.l.bf16 %v285
    %v720 = vunpack.c.h.bf16 %v285
    %v721 = vunpack.c.l.bf16 %v286
    %v722 = vunpack.c.h.bf16 %v286
    %v723 = vunpack.c.l.bf16 %v287
    %v724 = vunpack.c.h.bf16 %v287
    %v725 = vunpack.c.l.bf16 %v288
    %v726 = vunpack.c.h.bf16 %v288
    %v727 = vunpack.c.l.bf16 %v289
    %v728 = vunpack.c.h.bf16 %v289
    %v729 = vunpack.c.l.bf16 %v290
    %v730 = vunpack.c.h.bf16 %v290
    %v731 = vunpack.c.l.bf16 %v291
    %v732 = vunpack.c.h.bf16 %v291
    %v733 = vunpack.c.l.bf16 %v292
    %v734 = vunpack.c.h.bf16 %v292
    %v735 = vunpack.c.l.bf16 %v293
    %v736 = vunpack.c.h.bf16 %v293
    %v737 = vunpack.c.l.bf16 %v294
    %v738 = vunpack.c.h.bf16 %v294
    %v739 = vunpack.c.l.bf16 %v295
    %v740 = vunpack.c.h.bf16 %v295
    %v741 = vunpack.c.l.bf16 %v296
    %v742 = vunpack.c.h.bf16 %v296
    %v743 = vunpack.c.l.bf16 %v297
    %v744 = vunpack.c.h.bf16 %v297
    %v745 = vunpack.c.l.bf16 %v298
    %v746 = vunpack.c.h.bf16 %v298
    %v747 = vunpack.c.l.bf16 %v299
    %v748 = vunpack.c.h.bf16 %v299
    %v749 = vunpack.c.l.bf16 %v300
    %v750 = vunpack.c.h.bf16 %v300
    %v751 = vunpack.c.l.bf16 %v301
    %v752 = vunpack.c.h.bf16 %v301
    %v753 = vunpack.c.l.bf16 %v302
    %v754 = vunpack.c.h.bf16 %v302
    %v755 = vunpack.c.l.bf16 %v303
    %v756 = vunpack.c.h.bf16 %v303
    %v757 = vunpack.c.l.bf16 %v304
    %v758 = vunpack.c.h.bf16 %v304
    %v759 = vunpack.c.l.bf16 %v305
    %v760 = vunpack.c.h.bf16 %v305
    %v761 = vunpack.c.l.bf16 %v306
    %v762 = vunpack.c.h.bf16 %v306
    %v763 = vunpack.c.l.bf16 %v307
    %v764 = vunpack.c.h.bf16 %v307
    %v765 = vunpack.c.l.bf16 %v308
    %v766 = vunpack.c.h.bf16 %v308
    %v767 = vunpack.c.l.bf16 %v309
    %v768 = vunpack.c.h.bf16 %v309
    %v769 = vunpack.c.l.bf16 %v310
    %v770 = vunpack.c.h.bf16 %v310
    %v771 = vunpack.c.l.bf16 %v311
    %v772 = vunpack.c.h.bf16 %v311
    %v773 = vunpack.c.l.bf16 %v312
    %v774 = vunpack.c.h.bf16 %v312
    %v775 = vunpack.c.l.bf16 %v313
    %v776 = vunpack.c.h.bf16 %v313
    %v777 = vunpack.c.l.bf16 %v314
    %v778 = vunpack.c.h.bf16 %v314
    %v779 = vunpack.c.l.bf16 %v315
    %v780 = vunpack.c.h.bf16 %v315
    %v781 = vunpack.c.l.bf16 %v316
    %v782 = vunpack.c.h.bf16 %v316
    %v783 = vunpack.c.l.bf16 %v317
    %v784 = vunpack.c.h.bf16 %v317
    %v785 = vunpack.c.l.bf16 %v318
    %v786 = vunpack.c.h.bf16 %v318
    %v787 = vunpack.c.l.bf16 %v319
    %v788 = vunpack.c.h.bf16 %v319
    %v789 = vunpack.c.l.bf16 %v320
    %v790 = vunpack.c.h.bf16 %v320
    %v791 = vunpack.c.l.bf16 %v321
    %v792 = vunpack.c.h.bf16 %v321
    %v793 = vunpack.c.l.bf16 %v322
    %v794 = vunpack.c.h.bf16 %v322
    %v795 = vunpack.c.l.bf16 %v323
    %v796 = vunpack.c.h.bf16 %v323
    %v797 = vunpack.c.l.bf16 %v324
    %v798 = vunpack.c.h.bf16 %v324
    %v799 = vunpack.c.l.bf16 %v325
    %v800 = vunpack.c.h.bf16 %v325
    %v801 = vunpack.c.l.bf16 %v326
    %v802 = vunpack.c.h.bf16 %v326
    %v803 = vunpack.c.l.bf16 %v327
    %v804 = vunpack.c.h.bf16 %v327
    %v805 = vunpack.c.l.bf16 %v328
    %v806 = vunpack.c.h.bf16 %v328
    %v807 = vunpack.c.l.bf16 %v329
    %v808 = vunpack.c.h.bf16 %v329
    %v809 = vunpack.c.l.bf16 %v330
    %v810 = vunpack.c.h.bf16 %v330
    %v811 = vunpack.c.l.bf16 %v331
    %v812 = vunpack.c.h.bf16 %v331
    %v813 = vunpack.c.l.bf16 %v332
    %v814 = vunpack.c.h.bf16 %v332
    %v815 = vunpack.c.l.bf16 %v333
    %v816 = vunpack.c.h.bf16 %v333
    %v817 = vunpack.c.l.bf16 %v334
    %v818 = vunpack.c.h.bf16 %v334
    %v819 = vunpack.c.l.bf16 %v335
    %v820 = vunpack.c.h.bf16 %v335
    %v821 = vunpack.c.l.bf16 %v336
    %v822 = vunpack.c.h.bf16 %v336
    %v823 = vunpack.c.l.bf16 %v337
    %v824 = vunpack.c.h.bf16 %v337
    %v825 = vunpack.c.l.bf16 %v338
    %v826 = vunpack.c.h.bf16 %v338
    %v827 = vunpack.c.l.bf16 %v339
    %v828 = vunpack.c.h.bf16 %v339
    %v829 = vunpack.c.l.bf16 %v340
    %v830 = vunpack.c.h.bf16 %v340
    %v831 = vunpack.c.l.bf16 %v341
    %v832 = vunpack.c.h.bf16 %v341
    %v833 = vunpack.c.l.bf16 %v342
    %v834 = vunpack.c.h.bf16 %v342
    %v835 = vunpack.c.l.bf16 %v343
    %v836 = vunpack.c.h.bf16 %v343
    %v837 = vunpack.c.l.bf16 %v344
    %v838 = vunpack.c.h.bf16 %v344
    %v839 = vunpack.c.l.bf16 %v345
    %v840 = vunpack.c.h.bf16 %v345
    %v841 = vunpack.c.l.bf16 %v346
    %v842 = vunpack.c.h.bf16 %v346
    %v843 = vunpack.c.l.bf16 %v347
    %v844 = vunpack.c.h.bf16 %v347
    %v845 = vunpack.c.l.bf16 %v348
    %v846 = vunpack.c.h.bf16 %v348
    %v847 = vunpack.c.l.bf16 %v349
    %v848 = vunpack.c.h.bf16 %v349
    %v849 = vunpack.c.l.bf16 %v350
    %v850 = vunpack.c.h.bf16 %v350
    %v851 = vunpack.c.l.bf16 %v351
    %v852 = vunpack.c.h.bf16 %v351
    %v853 = vunpack.c.l.bf16 %v352
    %v854 = vunpack.c.h.bf16 %v352
    %v855 = vunpack.c.l.bf16 %v353
    %v856 = vunpack.c.h.bf16 %v353
    %v857 = vunpack.c.l.bf16 %v354
    %v858 = vunpack.c.h.bf16 %v354
    %v859 = vunpack.c.l.bf16 %v355
    %v860 = vunpack.c.h.bf16 %v355
    %v861 = vunpack.c.l.bf16 %v356
    %v862 = vunpack.c.h.bf16 %v356
    %v863 = vunpack.c.l.bf16 %v357
    %v864 = vunpack.c.h.bf16 %v357
    %v865 = vunpack.c.l.bf16 %v358
    %v866 = vunpack.c.h.bf16 %v358
    %v867 = vunpack.c.l.bf16 %v359
    %v868 = vunpack.c.h.bf16 %v359
    %v869 = vunpack.c.l.bf16 %v360
    %v870 = vunpack.c.h.bf16 %v360
    %v871 = vunpack.c.l.bf16 %v361
    %v872 = vunpack.c.h.bf16 %v361
    %v873 = vunpack.c.l.bf16 %v362
    %v874 = vunpack.c.h.bf16 %v362
    %v875 = vadd.f32 %v363, %v365
    %v876 = vadd.f32 %v875, %v367
    %v877 = vadd.f32 %v876, %v369
    %v878 = vadd.f32 %v877, %v371
    %v879 = vadd.f32 %v878, %v373
    %v880 = vadd.f32 %v879, %v375
    %v881 = vadd.f32 %v880, %v377
    %v882 = vadd.f32 %v881, %v379
    %v883 = vadd.f32 %v882, %v381
    %v884 = vadd.f32 %v883, %v383
    %v885 = vadd.f32 %v884, %v385
    %v886 = vadd.f32 %v885, %v387
    %v887 = vadd.f32 %v886, %v389
    %v888 = vadd.f32 %v887, %v391
    %v889 = vadd.f32 %v888, %v393
    %v890 = vadd.f32 %v889, %v395
    %v891 = vadd.f32 %v890, %v397
    %v892 = vadd.f32 %v891, %v399
    %v893 = vadd.f32 %v892, %v401
    %v894 = vadd.f32 %v893, %v403
    %v895 = vadd.f32 %v894, %v405
    %v896 = vadd.f32 %v895, %v407
    %v897 = vadd.f32 %v896, %v409
    %v898 = vadd.f32 %v897, %v411
    %v899 = vadd.f32 %v898, %v413
    %v900 = vadd.f32 %v899, %v415
    %v901 = vadd.f32 %v900, %v417
    %v902 = vadd.f32 %v901, %v419
    %v903 = vadd.f32 %v902, %v421
    %v904 = vadd.f32 %v903, %v423
    %v905 = vadd.f32 %v904, %v425
    %v906 = vrot.slane %v905, 4
    %v907 = vadd.f32 %v905, %v906
    %v908 = vrot.slane %v907, 2
    %v909 = vadd.f32 %v907, %v908
    %v910 = vrot.slane %v909, 1
    %v911 = vadd.f32 %v909, %v910
    %v912 = vadd.f32 %v364, %v366
    %v913 = vadd.f32 %v912, %v368
    %v914 = vadd.f32 %v913, %v370
    %v915 = vadd.f32 %v914, %v372
    %v916 = vadd.f32 %v915, %v374
    %v917 = vadd.f32 %v916, %v376
    %v918 = vadd.f32 %v917, %v378
    %v919 = vadd.f32 %v918, %v380
    %v920 = vadd.f32 %v919, %v382
    %v921 = vadd.f32 %v920, %v384
    %v922 = vadd.f32 %v921, %v386
    %v923 = vadd.f32 %v922, %v388
    %v924 = vadd.f32 %v923, %v390
    %v925 = vadd.f32 %v924, %v392
    %v926 = vadd.f32 %v925, %v394
    %v927 = vadd.f32 %v926, %v396
    %v928 = vadd.f32 %v927, %v398
    %v929 = vadd.f32 %v928, %v400
    %v930 = vadd.f32 %v929, %v402
    %v931 = vadd.f32 %v930, %v404
    %v932 = vadd.f32 %v931, %v406
    %v933 = vadd.f32 %v932, %v408
    %v934 = vadd.f32 %v933, %v410
    %v935 = vadd.f32 %v934, %v412
    %v936 = vadd.f32 %v935, %v414
    %v937 = vadd.f32 %v936, %v416
    %v938 = vadd.f32 %v937, %v418
    %v939 = vadd.f32 %v938, %v420
    %v940 = vadd.f32 %v939, %v422
    %v941 = vadd.f32 %v940, %v424
    %v942 = vadd.f32 %v941, %v426
    %v943 = vrot.slane %v942, 4
    %v944 = vadd.f32 %v942, %v943
    %v945 = vrot.slane %v944, 2
    %v946 = vadd.f32 %v944, %v945
    %v947 = vrot.slane %v946, 1
    %v948 = vadd.f32 %v946, %v947
    %v949 = vadd.f32 %v427, %v429
    %v950 = vadd.f32 %v949, %v431
    %v951 = vadd.f32 %v950, %v433
    %v952 = vadd.f32 %v951, %v435
    %v953 = vadd.f32 %v952, %v437
    %v954 = vadd.f32 %v953, %v439
    %v955 = vadd.f32 %v954, %v441
    %v956 = vadd.f32 %v955, %v443
    %v957 = vadd.f32 %v956, %v445
    %v958 = vadd.f32 %v957, %v447
    %v959 = vadd.f32 %v958, %v449
    %v960 = vadd.f32 %v959, %v451
    %v961 = vadd.f32 %v960, %v453
    %v962 = vadd.f32 %v961, %v455
    %v963 = vadd.f32 %v962, %v457
    %v964 = vadd.f32 %v963, %v459
    %v965 = vadd.f32 %v964, %v461
    %v966 = vadd.f32 %v965, %v463
    %v967 = vadd.f32 %v966, %v465
    %v968 = vadd.f32 %v967, %v467
    %v969 = vadd.f32 %v968, %v469
    %v970 = vadd.f32 %v969, %v471
    %v971 = vadd.f32 %v970, %v473
    %v972 = vadd.f32 %v971, %v475
    %v973 = vadd.f32 %v972, %v477
    %v974 = vadd.f32 %v973, %v479
    %v975 = vadd.f32 %v974, %v481
    %v976 = vadd.f32 %v975, %v483
    %v977 = vadd.f32 %v976, %v485
    %v978 = vadd.f32 %v977, %v487
    %v979 = vadd.f32 %v978, %v489
    %v980 = vrot.slane %v979, 4
    %v981 = vadd.f32 %v979, %v980
    %v982 = vrot.slane %v981, 2
    %v983 = vadd.f32 %v981, %v982
    %v984 = vrot.slane %v983, 1
    %v985 = vadd.f32 %v983, %v984
    %v986 = vadd.f32 %v428, %v430
    %v987 = vadd.f32 %v986, %v432
    %v988 = vadd.f32 %v987, %v434
    %v989 = vadd.f32 %v988, %v436
    %v990 = vadd.f32 %v989, %v438
    %v991 = vadd.f32 %v990, %v440
    %v992 = vadd.f32 %v991, %v442
    %v993 = vadd.f32 %v992, %v444
    %v994 = vadd.f32 %v993, %v446
    %v995 = vadd.f32 %v994, %v448
    %v996 = vadd.f32 %v995, %v450
    %v997 = vadd.f32 %v996, %v452
    %v998 = vadd.f32 %v997, %v454
    %v999 = vadd.f32 %v998, %v456
    %v1000 = vadd.f32 %v999, %v458
    %v1001 = vadd.f32 %v1000, %v460
    %v1002 = vadd.f32 %v1001, %v462
    %v1003 = vadd.f32 %v1002, %v464
    %v1004 = vadd.f32 %v1003, %v466
    %v1005 = vadd.f32 %v1004, %v468
    %v1006 = vadd.f32 %v1005, %v470
    %v1007 = vadd.f32 %v1006, %v472
    %v1008 = vadd.f32 %v1007, %v474
    %v1009 = vadd.f32 %v1008, %v476
    %v1010 = vadd.f32 %v1009, %v478
    %v1011 = vadd.f32 %v1010, %v480
    %v1012 = vadd.f32 %v1011, %v482
    %v1013 = vadd.f32 %v1012, %v484
    %v1014 = vadd.f32 %v1013, %v486
    %v1015 = vadd.f32 %v1014, %v488
    %v1016 = vadd.f32 %v1015, %v490
    %v1017 = vrot.slane %v1016, 4
    %v1018 = vadd.f32 %v1016, %v1017
    %v1019 = vrot.slane %v1018, 2
    %v1020 = vadd.f32 %v1018, %v1019
    %v1021 = vrot.slane %v1020, 1
    %v1022 = vadd.f32 %v1020, %v1021
    %v1023 = vadd.f32 %v491, %v493
    %v1024 = vadd.f32 %v1023, %v495
    %v1025 = vadd.f32 %v1024, %v497
    %v1026 = vadd.f32 %v1025, %v499
    %v1027 = vadd.f32 %v1026, %v501
    %v1028 = vadd.f32 %v1027, %v503
    %v1029 = vadd.f32 %v1028, %v505
    %v1030 = vadd.f32 %v1029, %v507
    %v1031 = vadd.f32 %v1030, %v509
    %v1032 = vadd.f32 %v1031, %v511
    %v1033 = vadd.f32 %v1032, %v513
    %v1034 = vadd.f32 %v1033, %v515
    %v1035 = vadd.f32 %v1034, %v517
    %v1036 = vadd.f32 %v1035, %v519
    %v1037 = vadd.f32 %v1036, %v521
    %v1038 = vadd.f32 %v1037, %v523
    %v1039 = vadd.f32 %v1038, %v525
    %v1040 = vadd.f32 %v1039, %v527
    %v1041 = vadd.f32 %v1040, %v529
    %v1042 = vadd.f32 %v1041, %v531
    %v1043 = vadd.f32 %v1042, %v533
    %v1044 = vadd.f32 %v1043, %v535
    %v1045 = vadd.f32 %v1044, %v537
    %v1046 = vadd.f32 %v1045, %v539
    %v1047 = vadd.f32 %v1046, %v541
    %v1048 = vadd.f32 %v1047, %v543
    %v1049 = vadd.f32 %v1048, %v545
    %v1050 = vadd.f32 %v1049, %v547
    %v1051 = vadd.f32 %v1050, %v549
    %v1052 = vadd.f32 %v1051, %v551
    %v1053 = vadd.f32 %v1052, %v553
    %v1054 = vrot.slane %v1053, 4
    %v1055 = vadd.f32 %v1053, %v1054
    %v1056 = vrot.slane %v1055, 2
    %v1057 = vadd.f32 %v1055, %v1056
    %v1058 = vrot.slane %v1057, 1
    %v1059 = vadd.f32 %v1057, %v1058
    %v1060 = vadd.f32 %v492, %v494
    %v1061 = vadd.f32 %v1060, %v496
    %v1062 = vadd.f32 %v1061, %v498
    %v1063 = vadd.f32 %v1062, %v500
    %v1064 = vadd.f32 %v1063, %v502
    %v1065 = vadd.f32 %v1064, %v504
    %v1066 = vadd.f32 %v1065, %v506
    %v1067 = vadd.f32 %v1066, %v508
    %v1068 = vadd.f32 %v1067, %v510
    %v1069 = vadd.f32 %v1068, %v512
    %v1070 = vadd.f32 %v1069, %v514
    %v1071 = vadd.f32 %v1070, %v516
    %v1072 = vadd.f32 %v1071, %v518
    %v1073 = vadd.f32 %v1072, %v520
    %v1074 = vadd.f32 %v1073, %v522
    %v1075 = vadd.f32 %v1074, %v524
    %v1076 = vadd.f32 %v1075, %v526
    %v1077 = vadd.f32 %v1076, %v528
    %v1078 = vadd.f32 %v1077, %v530
    %v1079 = vadd.f32 %v1078, %v532
    %v1080 = vadd.f32 %v1079, %v534
    %v1081 = vadd.f32 %v1080, %v536
    %v1082 = vadd.f32 %v1081, %v538
    %v1083 = vadd.f32 %v1082, %v540
    %v1084 = vadd.f32 %v1083, %v542
    %v1085 = vadd.f32 %v1084, %v544
    %v1086 = vadd.f32 %v1085, %v546
    %v1087 = vadd.f32 %v1086, %v548
    %v1088 = vadd.f32 %v1087, %v550
    %v1089 = vadd.f32 %v1088, %v552
    %v1090 = vadd.f32 %v1089, %v554
    %v1091 = vrot.slane %v1090, 4
    %v1092 = vadd.f32 %v1090, %v1091
    %v1093 = vrot.slane %v1092, 2
    %v1094 = vadd.f32 %v1092, %v1093
    %v1095 = vrot.slane %v1094, 1
    %v1096 = vadd.f32 %v1094, %v1095
    %v1097 = vadd.f32 %v555, %v557
    %v1098 = vadd.f32 %v1097, %v559
    %v1099 = vadd.f32 %v1098, %v561
    %v1100 = vadd.f32 %v1099, %v563
    %v1101 = vadd.f32 %v1100, %v565
    %v1102 = vadd.f32 %v1101, %v567
    %v1103 = vadd.f32 %v1102, %v569
    %v1104 = vadd.f32 %v1103, %v571
    %v1105 = vadd.f32 %v1104, %v573
    %v1106 = vadd.f32 %v1105, %v575
    %v1107 = vadd.f32 %v1106, %v577
    %v1108 = vadd.f32 %v1107, %v579
    %v1109 = vadd.f32 %v1108, %v581
    %v1110 = vadd.f32 %v1109, %v583
    %v1111 = vadd.f32 %v1110, %v585
    %v1112 = vadd.f32 %v1111, %v587
    %v1113 = vadd.f32 %v1112, %v589
    %v1114 = vadd.f32 %v1113, %v591
    %v1115 = vadd.f32 %v1114, %v593
    %v1116 = vadd.f32 %v1115, %v595
    %v1117 = vadd.f32 %v1116, %v597
    %v1118 = vadd.f32 %v1117, %v599
    %v1119 = vadd.f32 %v1118, %v601
    %v1120 = vadd.f32 %v1119, %v603
    %v1121 = vadd.f32 %v1120, %v605
    %v1122 = vadd.f32 %v1121, %v607
    %v1123 = vadd.f32 %v1122, %v609
    %v1124 = vadd.f32 %v1123, %v611
    %v1125 = vadd.f32 %v1124, %v613
    %v1126 = vadd.f32 %v1125, %v615
    %v1127 = vadd.f32 %v1126, %v617
    %v1128 = vrot.slane %v1127, 4
    %v1129 = vadd.f32 %v1127, %v1128
    %v1130 = vrot.slane %v1129, 2
    %v1131 = vadd.f32 %v1129, %v1130
    %v1132 = vrot.slane %v1131, 1
    %v1133 = vadd.f32 %v1131, %v1132
    %v1134 = vadd.f32 %v556, %v558
    %v1135 = vadd.f32 %v1134, %v560
    %v1136 = vadd.f32 %v1135, %v562
    %v1137 = vadd.f32 %v1136, %v564
    %v1138 = vadd.f32 %v1137, %v566
    %v1139 = vadd.f32 %v1138, %v568
    %v1140 = vadd.f32 %v1139, %v570
    %v1141 = vadd.f32 %v1140, %v572
    %v1142 = vadd.f32 %v1141, %v574
    %v1143 = vadd.f32 %v1142, %v576
    %v1144 = vadd.f32 %v1143, %v578
    %v1145 = vadd.f32 %v1144, %v580
    %v1146 = vadd.f32 %v1145, %v582
    %v1147 = vadd.f32 %v1146, %v584
    %v1148 = vadd.f32 %v1147, %v586
    %v1149 = vadd.f32 %v1148, %v588
    %v1150 = vadd.f32 %v1149, %v590
    %v1151 = vadd.f32 %v1150, %v592
    %v1152 = vadd.f32 %v1151, %v594
    %v1153 = vadd.f32 %v1152, %v596
    %v1154 = vadd.f32 %v1153, %v598
    %v1155 = vadd.f32 %v1154, %v600
    %v1156 = vadd.f32 %v1155, %v602
    %v1157 = vadd.f32 %v1156, %v604
    %v1158 = vadd.f32 %v1157, %v606
    %v1159 = vadd.f32 %v1158, %v608
    %v1160 = vadd.f32 %v1159, %v610
    %v1161 = vadd.f32 %v1160, %v612
    %v1162 = vadd.f32 %v1161, %v614
    %v1163 = vadd.f32 %v1162, %v616
    %v1164 = vadd.f32 %v1163, %v618
    %v1165 = vrot.slane %v1164, 4
    %v1166 = vadd.f32 %v1164, %v1165
    %v1167 = vrot.slane %v1166, 2
    %v1168 = vadd.f32 %v1166, %v1167
    %v1169 = vrot.slane %v1168, 1
    %v1170 = vadd.f32 %v1168, %v1169
    %v1171 = vadd.f32 %v619, %v621
    %v1172 = vadd.f32 %v1171, %v623
    %v1173 = vadd.f32 %v1172, %v625
    %v1174 = vadd.f32 %v1173, %v627
    %v1175 = vadd.f32 %v1174, %v629
    %v1176 = vadd.f32 %v1175, %v631
    %v1177 = vadd.f32 %v1176, %v633
    %v1178 = vadd.f32 %v1177, %v635
    %v1179 = vadd.f32 %v1178, %v637
    %v1180 = vadd.f32 %v1179, %v639
    %v1181 = vadd.f32 %v1180, %v641
    %v1182 = vadd.f32 %v1181, %v643
    %v1183 = vadd.f32 %v1182, %v645
    %v1184 = vadd.f32 %v1183, %v647
    %v1185 = vadd.f32 %v1184, %v649
    %v1186 = vadd.f32 %v1185, %v651
    %v1187 = vadd.f32 %v1186, %v653
    %v1188 = vadd.f32 %v1187, %v655
    %v1189 = vadd.f32 %v1188, %v657
    %v1190 = vadd.f32 %v1189, %v659
    %v1191 = vadd.f32 %v1190, %v661
    %v1192 = vadd.f32 %v1191, %v663
    %v1193 = vadd.f32 %v1192, %v665
    %v1194 = vadd.f32 %v1193, %v667
    %v1195 = vadd.f32 %v1194, %v669
    %v1196 = vadd.f32 %v1195, %v671
    %v1197 = vadd.f32 %v1196, %v673
    %v1198 = vadd.f32 %v1197, %v675
    %v1199 = vadd.f32 %v1198, %v677
    %v1200 = vadd.f32 %v1199, %v679
    %v1201 = vadd.f32 %v1200, %v681
    %v1202 = vrot.slane %v1201, 4
    %v1203 = vadd.f32 %v1201, %v1202
    %v1204 = vrot.slane %v1203, 2
    %v1205 = vadd.f32 %v1203, %v1204
    %v1206 = vrot.slane %v1205, 1
    %v1207 = vadd.f32 %v1205, %v1206
    %v1208 = vadd.f32 %v620, %v622
    %v1209 = vadd.f32 %v1208, %v624
    %v1210 = vadd.f32 %v1209, %v626
    %v1211 = vadd.f32 %v1210, %v628
    %v1212 = vadd.f32 %v1211, %v630
    %v1213 = vadd.f32 %v1212, %v632
    %v1214 = vadd.f32 %v1213, %v634
    %v1215 = vadd.f32 %v1214, %v636
    %v1216 = vadd.f32 %v1215, %v638
    %v1217 = vadd.f32 %v1216, %v640
    %v1218 = vadd.f32 %v1217, %v642
    %v1219 = vadd.f32 %v1218, %v644
    %v1220 = vadd.f32 %v1219, %v646
    %v1221 = vadd.f32 %v1220, %v648
    %v1222 = vadd.f32 %v1221, %v650
    %v1223 = vadd.f32 %v1222, %v652
    %v1224 = vadd.f32 %v1223, %v654
    %v1225 = vadd.f32 %v1224, %v656
    %v1226 = vadd.f32 %v1225, %v658
    %v1227 = vadd.f32 %v1226, %v660
    %v1228 = vadd.f32 %v1227, %v662
    %v1229 = vadd.f32 %v1228, %v664
    %v1230 = vadd.f32 %v1229, %v666
    %v1231 = vadd.f32 %v1230, %v668
    %v1232 = vadd.f32 %v1231, %v670
    %v1233 = vadd.f32 %v1232, %v672
    %v1234 = vadd.f32 %v1233, %v674
    %v1235 = vadd.f32 %v1234, %v676
    %v1236 = vadd.f32 %v1235, %v678
    %v1237 = vadd.f32 %v1236, %v680
    %v1238 = vadd.f32 %v1237, %v682
    %v1239 = vrot.slane %v1238, 4
    %v1240 = vadd.f32 %v1238, %v1239
    %v1241 = vrot.slane %v1240, 2
    %v1242 = vadd.f32 %v1240, %v1241
    %v1243 = vrot.slane %v1242, 1
    %v1244 = vadd.f32 %v1242, %v1243
    %v1245 = vadd.f32 %v683, %v685
    %v1246 = vadd.f32 %v1245, %v687
    %v1247 = vadd.f32 %v1246, %v689
    %v1248 = vadd.f32 %v1247, %v691
    %v1249 = vadd.f32 %v1248, %v693
    %v1250 = vadd.f32 %v1249, %v695
    %v1251 = vadd.f32 %v1250, %v697
    %v1252 = vadd.f32 %v1251, %v699
    %v1253 = vadd.f32 %v1252, %v701
    %v1254 = vadd.f32 %v1253, %v703
    %v1255 = vadd.f32 %v1254, %v705
    %v1256 = vadd.f32 %v1255, %v707
    %v1257 = vadd.f32 %v1256, %v709
    %v1258 = vadd.f32 %v1257, %v711
    %v1259 = vadd.f32 %v1258, %v713
    %v1260 = vadd.f32 %v1259, %v715
    %v1261 = vadd.f32 %v1260, %v717
    %v1262 = vadd.f32 %v1261, %v719
    %v1263 = vadd.f32 %v1262, %v721
    %v1264 = vadd.f32 %v1263, %v723
    %v1265 = vadd.f32 %v1264, %v725
    %v1266 = vadd.f32 %v1265, %v727
    %v1267 = vadd.f32 %v1266, %v729
    %v1268 = vadd.f32 %v1267, %v731
    %v1269 = vadd.f32 %v1268, %v733
    %v1270 = vadd.f32 %v1269, %v735
    %v1271 = vadd.f32 %v1270, %v737
    %v1272 = vadd.f32 %v1271, %v739
    %v1273 = vadd.f32 %v1272, %v741
    %v1274 = vadd.f32 %v1273, %v743
    %v1275 = vadd.f32 %v1274, %v745
    %v1276 = vrot.slane %v1275, 4
    %v1277 = vadd.f32 %v1275, %v1276
    %v1278 = vrot.slane %v1277, 2
    %v1279 = vadd.f32 %v1277, %v1278
    %v1280 = vrot.slane %v1279, 1
    %v1281 = vadd.f32 %v1279, %v1280
    %v1282 = vadd.f32 %v684, %v686
    %v1283 = vadd.f32 %v1282, %v688
    %v1284 = vadd.f32 %v1283, %v690
    %v1285 = vadd.f32 %v1284, %v692
    %v1286 = vadd.f32 %v1285, %v694
    %v1287 = vadd.f32 %v1286, %v696
    %v1288 = vadd.f32 %v1287, %v698
    %v1289 = vadd.f32 %v1288, %v700
    %v1290 = vadd.f32 %v1289, %v702
    %v1291 = vadd.f32 %v1290, %v704
    %v1292 = vadd.f32 %v1291, %v706
    %v1293 = vadd.f32 %v1292, %v708
    %v1294 = vadd.f32 %v1293, %v710
    %v1295 = vadd.f32 %v1294, %v712
    %v1296 = vadd.f32 %v1295, %v714
    %v1297 = vadd.f32 %v1296, %v716
    %v1298 = vadd.f32 %v1297, %v718
    %v1299 = vadd.f32 %v1298, %v720
    %v1300 = vadd.f32 %v1299, %v722
    %v1301 = vadd.f32 %v1300, %v724
    %v1302 = vadd.f32 %v1301, %v726
    %v1303 = vadd.f32 %v1302, %v728
    %v1304 = vadd.f32 %v1303, %v730
    %v1305 = vadd.f32 %v1304, %v732
    %v1306 = vadd.f32 %v1305, %v734
    %v1307 = vadd.f32 %v1306, %v736
    %v1308 = vadd.f32 %v1307, %v738
    %v1309 = vadd.f32 %v1308, %v740
    %v1310 = vadd.f32 %v1309, %v742
    %v1311 = vadd.f32 %v1310, %v744
    %v1312 = vadd.f32 %v1311, %v746
    %v1313 = vrot.slane %v1312, 4
    %v1314 = vadd.f32 %v1312, %v1313
    %v1315 = vrot.slane %v1314, 2
    %v1316 = vadd.f32 %v1314, %v1315
    %v1317 = vrot.slane %v1316, 1
    %v1318 = vadd.f32 %v1316, %v1317
    %v1319 = vadd.f32 %v747, %v749
    %v1320 = vadd.f32 %v1319, %v751
    %v1321 = vadd.f32 %v1320, %v753
    %v1322 = vadd.f32 %v1321, %v755
    %v1323 = vadd.f32 %v1322, %v757
    %v1324 = vadd.f32 %v1323, %v759
    %v1325 = vadd.f32 %v1324, %v761
    %v1326 = vadd.f32 %v1325, %v763
    %v1327 = vadd.f32 %v1326, %v765
    %v1328 = vadd.f32 %v1327, %v767
    %v1329 = vadd.f32 %v1328, %v769
    %v1330 = vadd.f32 %v1329, %v771
    %v1331 = vadd.f32 %v1330, %v773
    %v1332 = vadd.f32 %v1331, %v775
    %v1333 = vadd.f32 %v1332, %v777
    %v1334 = vadd.f32 %v1333, %v779
    %v1335 = vadd.f32 %v1334, %v781
    %v1336 = vadd.f32 %v1335, %v783
    %v1337 = vadd.f32 %v1336, %v785
    %v1338 = vadd.f32 %v1337, %v787
    %v1339 = vadd.f32 %v1338, %v789
    %v1340 = vadd.f32 %v1339, %v791
    %v1341 = vadd.f32 %v1340, %v793
    %v1342 = vadd.f32 %v1341, %v795
    %v1343 = vadd.f32 %v1342, %v797
    %v1344 = vadd.f32 %v1343, %v799
    %v1345 = vadd.f32 %v1344, %v801
    %v1346 = vadd.f32 %v1345, %v803
    %v1347 = vadd.f32 %v1346, %v805
    %v1348 = vadd.f32 %v1347, %v807
    %v1349 = vadd.f32 %v1348, %v809
    %v1350 = vrot.slane %v1349, 4
    %v1351 = vadd.f32 %v1349, %v1350
    %v1352 = vrot.slane %v1351, 2
    %v1353 = vadd.f32 %v1351, %v1352
    %v1354 = vrot.slane %v1353, 1
    %v1355 = vadd.f32 %v1353, %v1354
    %v1356 = vadd.f32 %v748, %v750
    %v1357 = vadd.f32 %v1356, %v752
    %v1358 = vadd.f32 %v1357, %v754
    %v1359 = vadd.f32 %v1358, %v756
    %v1360 = vadd.f32 %v1359, %v758
    %v1361 = vadd.f32 %v1360, %v760
    %v1362 = vadd.f32 %v1361, %v762
    %v1363 = vadd.f32 %v1362, %v764
    %v1364 = vadd.f32 %v1363, %v766
    %v1365 = vadd.f32 %v1364, %v768
    %v1366 = vadd.f32 %v1365, %v770
    %v1367 = vadd.f32 %v1366, %v772
    %v1368 = vadd.f32 %v1367, %v774
    %v1369 = vadd.f32 %v1368, %v776
    %v1370 = vadd.f32 %v1369, %v778
    %v1371 = vadd.f32 %v1370, %v780
    %v1372 = vadd.f32 %v1371, %v782
    %v1373 = vadd.f32 %v1372, %v784
    %v1374 = vadd.f32 %v1373, %v786
    %v1375 = vadd.f32 %v1374, %v788
    %v1376 = vadd.f32 %v1375, %v790
    %v1377 = vadd.f32 %v1376, %v792
    %v1378 = vadd.f32 %v1377, %v794
    %v1379 = vadd.f32 %v1378, %v796
    %v1380 = vadd.f32 %v1379, %v798
    %v1381 = vadd.f32 %v1380, %v800
    %v1382 = vadd.f32 %v1381, %v802
    %v1383 = vadd.f32 %v1382, %v804
    %v1384 = vadd.f32 %v1383, %v806
    %v1385 = vadd.f32 %v1384, %v808
    %v1386 = vadd.f32 %v1385, %v810
    %v1387 = vrot.slane %v1386, 4
    %v1388 = vadd.f32 %v1386, %v1387
    %v1389 = vrot.slane %v1388, 2
    %v1390 = vadd.f32 %v1388, %v1389
    %v1391 = vrot.slane %v1390, 1
    %v1392 = vadd.f32 %v1390, %v1391
    %v1393 = vadd.f32 %v811, %v813
    %v1394 = vadd.f32 %v1393, %v815
    %v1395 = vadd.f32 %v1394, %v817
    %v1396 = vadd.f32 %v1395, %v819
    %v1397 = vadd.f32 %v1396, %v821
    %v1398 = vadd.f32 %v1397, %v823
    %v1399 = vadd.f32 %v1398, %v825
    %v1400 = vadd.f32 %v1399, %v827
    %v1401 = vadd.f32 %v1400, %v829
    %v1402 = vadd.f32 %v1401, %v831
    %v1403 = vadd.f32 %v1402, %v833
    %v1404 = vadd.f32 %v1403, %v835
    %v1405 = vadd.f32 %v1404, %v837
    %v1406 = vadd.f32 %v1405, %v839
    %v1407 = vadd.f32 %v1406, %v841
    %v1408 = vadd.f32 %v1407, %v843
    %v1409 = vadd.f32 %v1408, %v845
    %v1410 = vadd.f32 %v1409, %v847
    %v1411 = vadd.f32 %v1410, %v849
    %v1412 = vadd.f32 %v1411, %v851
    %v1413 = vadd.f32 %v1412, %v853
    %v1414 = vadd.f32 %v1413, %v855
    %v1415 = vadd.f32 %v1414, %v857
    %v1416 = vadd.f32 %v1415, %v859
    %v1417 = vadd.f32 %v1416, %v861
    %v1418 = vadd.f32 %v1417, %v863
    %v1419 = vadd.f32 %v1418, %v865
    %v1420 = vadd.f32 %v1419, %v867
    %v1421 = vadd.f32 %v1420, %v869
    %v1422 = vadd.f32 %v1421, %v871
    %v1423 = vadd.f32 %v1422, %v873
    %v1424 = vrot.slane %v1423, 4
    %v1425 = vadd.f32 %v1423, %v1424
    %v1426 = vrot.slane %v1425, 2
    %v1427 = vadd.f32 %v1425, %v1426
    %v1428 = vrot.slane %v1427, 1
    %v1429 = vadd.f32 %v1427, %v1428
    %v1430 = vadd.f32 %v812, %v814
    %v1431 = vadd.f32 %v1430, %v816
    %v1432 = vadd.f32 %v1431, %v818
    %v1433 = vadd.f32 %v1432, %v820
    %v1434 = vadd.f32 %v1433, %v822
    %v1435 = vadd.f32 %v1434, %v824
    %v1436 = vadd.f32 %v1435, %v826
    %v1437 = vadd.f32 %v1436, %v828
    %v1438 = vadd.f32 %v1437, %v830
    %v1439 = vadd.f32 %v1438, %v832
    %v1440 = vadd.f32 %v1439, %v834
    %v1441 = vadd.f32 %v1440, %v836
    %v1442 = vadd.f32 %v1441, %v838
    %v1443 = vadd.f32 %v1442, %v840
    %v1444 = vadd.f32 %v1443, %v842
    %v1445 = vadd.f32 %v1444, %v844
    %v1446 = vadd.f32 %v1445, %v846
    %v1447 = vadd.f32 %v1446, %v848
    %v1448 = vadd.f32 %v1447, %v850
    %v1449 = vadd.f32 %v1448, %v852
    %v1450 = vadd.f32 %v1449, %v854
    %v1451 = vadd.f32 %v1450, %v856
    %v1452 = vadd.f32 %v1451, %v858
    %v1453 = vadd.f32 %v1452, %v860
    %v1454 = vadd.f32 %v1453, %v862
    %v1455 = vadd.f32 %v1454, %v864
    %v1456 = vadd.f32 %v1455, %v866
    %v1457 = vadd.f32 %v1456, %v868
    %v1458 = vadd.f32 %v1457, %v870
    %v1459 = vadd.f32 %v1458, %v872
    %v1460 = vadd.f32 %v1459, %v874
    %v1461 = vrot.slane %v1460, 4
    %v1462 = vadd.f32 %v1460, %v1461
    %v1463 = vrot.slane %v1462, 2
    %v1464 = vadd.f32 %v1462, %v1463
    %v1465 = vrot.slane %v1464, 1
    %v1466 = vadd.f32 %v1464, %v1465
    %v1467 = vrcp.pop 256.0
    %v1468 = vmul.f32 %v911, %v1467
    %v1469 = vmul.f32 %v948, %v1467
    %v1470 = vmul.f32 %v985, %v1467
    %v1471 = vmul.f32 %v1022, %v1467
    %v1472 = vmul.f32 %v1059, %v1467
    %v1473 = vmul.f32 %v1096, %v1467
    %v1474 = vmul.f32 %v1133, %v1467
    %v1475 = vmul.f32 %v1170, %v1467
    %v1476 = vmul.f32 %v1207, %v1467
    %v1477 = vmul.f32 %v1244, %v1467
    %v1478 = vmul.f32 %v1281, %v1467
    %v1479 = vmul.f32 %v1318, %v1467
    %v1480 = vmul.f32 %v1355, %v1467
    %v1481 = vmul.f32 %v1392, %v1467
    %v1482 = vmul.f32 %v1429, %v1467
    %v1483 = vmul.f32 %v1466, %v1467
    %v1484 = vld [vmem:[#allocation7] sm:$0xff]
    %v1485 = vld [vmem:[#allocation7 + $0x8] sm:$0xff]
    %v1486 = vld [vmem:[#allocation7 + $0x10] sm:$0xff]
    %v1487 = vld [vmem:[#allocation7 + $0x18] sm:$0xff]
    %v1488 = vld [vmem:[#allocation7 + $0x20] sm:$0xff]
    %v1489 = vld [vmem:[#allocation7 + $0x28] sm:$0xff]
    %v1490 = vld [vmem:[#allocation7 + $0x30] sm:$0xff]
    %v1491 = vld [vmem:[#allocation7 + $0x38] sm:$0xff]
    %v1492 = vld [vmem:[#allocation7 + $0x40] sm:$0xff]
    %v1493 = vld [vmem:[#allocation7 + $0x48] sm:$0xff]
    %v1494 = vld [vmem:[#allocation7 + $0x50] sm:$0xff]
    %v1495 = vld [vmem:[#allocation7 + $0x58] sm:$0xff]
    %v1496 = vld [vmem:[#allocation7 + $0x60] sm:$0xff]
    %v1497 = vld [vmem:[#allocation7 + $0x68] sm:$0xff]
    %v1498 = vld [vmem:[#allocation7 + $0x70] sm:$0xff]
    %v1499 = vld [vmem:[#allocation7 + $0x78] sm:$0xff]
    %v1500 = vld [vmem:[#allocation7 + $0x80] sm:$0xff]
    %v1501 = vld [vmem:[#allocation7 + $0x88] sm:$0xff]
    %v1502 = vld [vmem:[#allocation7 + $0x90] sm:$0xff]
    %v1503 = vld [vmem:[#allocation7 + $0x98] sm:$0xff]
    %v1504 = vld [vmem:[#allocation7 + $0xa0] sm:$0xff]
    %v1505 = vld [vmem:[#allocation7 + $0xa8] sm:$0xff]
    %v1506 = vld [vmem:[#allocation7 + $0xb0] sm:$0xff]
    %v1507 = vld [vmem:[#allocation7 + $0xb8] sm:$0xff]
    %v1508 = vld [vmem:[#allocation7 + $0xc0] sm:$0xff]
    %v1509 = vld [vmem:[#allocation7 + $0xc8] sm:$0xff]
    %v1510 = vld [vmem:[#allocation7 + $0xd0] sm:$0xff]
    %v1511 = vld [vmem:[#allocation7 + $0xd8] sm:$0xff]
    %v1512 = vld [vmem:[#allocation7 + $0xe0] sm:$0xff]
    %v1513 = vld [vmem:[#allocation7 + $0xe8] sm:$0xff]
    %v1514 = vld [vmem:[#allocation7 + $0xf0] sm:$0xff]
    %v1515 = vld [vmem:[#allocation7 + $0xf8] sm:$0xff]
    %vm1532 = vcmask 1041409
    %v1533 = vsel %vm1532, %v1470, %v1468
    %vm1534 = vcmask 1042434
    %v1535 = vsel %vm1534, %v1472, %v1533
    %vm1536 = vcmask 1043459
    %v1537 = vsel %vm1536, %v1474, %v1535
    %vm1538 = vcmask 1044484
    %v1539 = vsel %vm1538, %v1476, %v1537
    %vm1540 = vcmask 1045509
    %v1541 = vsel %vm1540, %v1478, %v1539
    %vm1542 = vcmask 1046534
    %v1543 = vsel %vm1542, %v1480, %v1541
    %vm1544 = vcmask 1047559
    %v1545 = vsel %vm1544, %v1482, %v1543
    %v1546 = vsel %vm1532, %v1471, %v1469
    %v1547 = vsel %vm1534, %v1473, %v1546
    %v1548 = vsel %vm1536, %v1475, %v1547
    %v1549 = vsel %vm1538, %v1477, %v1548
    %v1550 = vsel %vm1540, %v1479, %v1549
    %v1551 = vsel %vm1542, %v1481, %v1550
    %v1552 = vsel %vm1544, %v1483, %v1551
    %1555 = vmatprep.subr.mxu0 0.0
    %1556 = vmatpush1.msra.mxu0 %v1499
    %1557 = vmatprep.subr.mxu0 0.0
    %1558 = vmatpush1.msra.mxu0 %v1498
    %1559 = vmatprep.subr.mxu0 0.0
    %1560 = vmatpush1.msra.mxu0 %v1497
    %1561 = vmatprep.subr.mxu0 0.0
    %1562 = vmatpush1.msra.mxu0 %v1496
    %1563 = vmatprep.subr.mxu0 0.0
    %1564 = vmatpush1.msra.mxu0 %v1495
    %1565 = vmatprep.subr.mxu0 0.0
    %1566 = vmatpush1.msra.mxu0 %v1494
    %1567 = vmatprep.subr.mxu0 0.0
    %1568 = vmatpush1.msra.mxu0 %v1493
    %1569 = vmatprep.subr.mxu0 0.0
    %1570 = vmatpush1.msra.mxu0 %v1492
    %1571 = vmatprep.subr.mxu0 0.0
    %1572 = vmatpush1.msra.mxu0 %v1491
    %1573 = vmatprep.subr.mxu0 0.0
    %1574 = vmatpush1.msra.mxu0 %v1490
    %1575 = vmatprep.subr.mxu0 0.0
    %1576 = vmatpush1.msra.mxu0 %v1489
    %1577 = vmatprep.subr.mxu0 0.0
    %1578 = vmatpush1.msra.mxu0 %v1488
    %1579 = vmatprep.subr.mxu0 0.0
    %1580 = vmatpush1.msra.mxu0 %v1487
    %1581 = vmatprep.subr.mxu0 0.0
    %1582 = vmatpush1.msra.mxu0 %v1486
    %1583 = vmatprep.subr.mxu0 0.0
    %1584 = vmatpush1.msra.mxu0 %v1485
    %1585 = vmatprep.subr.mxu0 0.0
    %1586 = vmatpush1.msra.mxu0 %v1484
    %1587 = vmatprep.subr.mxu0 0.0
    %1588 = vmatpush2.msra.mxu0 %v1515
    %1589 = vmatprep.subr.mxu0 0.0
    %1590 = vmatpush2.msra.mxu0 %v1514
    %1591 = vmatprep.subr.mxu0 0.0
    %1592 = vmatpush2.msra.mxu0 %v1513
    %1593 = vmatprep.subr.mxu0 0.0
    %1594 = vmatpush2.msra.mxu0 %v1512
    %1595 = vmatprep.subr.mxu0 0.0
    %1596 = vmatpush2.msra.mxu0 %v1511
    %1597 = vmatprep.subr.mxu0 0.0
    %1598 = vmatpush2.msra.mxu0 %v1510
    %1599 = vmatprep.subr.mxu0 0.0
    %1600 = vmatpush2.msra.mxu0 %v1509
    %1601 = vmatprep.subr.mxu0 0.0
    %1602 = vmatpush2.msra.mxu0 %v1508
    %1603 = vmatprep.subr.mxu0 0.0
    %1604 = vmatpush2.msra.mxu0 %v1507
    %1605 = vmatprep.subr.mxu0 0.0
    %1606 = vmatpush2.msra.mxu0 %v1506
    %1607 = vmatprep.subr.mxu0 0.0
    %1608 = vmatpush2.msra.mxu0 %v1505
    %1609 = vmatprep.subr.mxu0 0.0
    %1610 = vmatpush2.msra.mxu0 %v1504
    %1611 = vmatprep.subr.mxu0 0.0
    %1612 = vmatpush2.msra.mxu0 %v1503
    %1613 = vmatprep.subr.mxu0 0.0
    %1614 = vmatpush2.msra.mxu0 %v1502
    %1615 = vmatprep.subr.mxu0 0.0
    %1616 = vmatpush2.msra.mxu0 %v1501
    %1617 = vmatprep.subr.mxu0 0.0
    %1618 = vmatpush2.msra.mxu0 %v1500
    %1619 = vmatprep.mubr.f32.mxu0 %v1552
    %1620 = vmatmul.mubr.f32.gmra.mxu0 %v1545
    %v1621 = vpop.f32.mrf.mxu0
    %v1622 = vadd.f32 0.0, %v1621
    %v1623 = vpop.f32.mrf.mxu0
    %1624 = vdwg.mxu0
    %v1625 = vld [vmem:[#allocation5] sm:$0xff]
    %v1626 = vld [vmem:[#allocation5 + $0x8] sm:$0xff]
    %v1627 = vld [vmem:[#allocation5 + $0x10] sm:$0xff]
    %v1628 = vld [vmem:[#allocation5 + $0x18] sm:$0xff]
    %v1629 = vunpack.c.l.bf16 %v1625
    %v1630 = vunpack.c.h.bf16 %v1625
    %v1631 = vunpack.c.l.bf16 %v1626
    %v1632 = vunpack.c.h.bf16 %v1626
    %v1633 = vunpack.c.l.bf16 %v1627
    %v1634 = vunpack.c.h.bf16 %v1627
    %v1635 = vunpack.c.l.bf16 %v1628
    %v1636 = vunpack.c.h.bf16 %v1628
    %v1637 = vld [vmem:[#allocation8] sm:$0xff]
    %v1638 = vld [vmem:[#allocation8 + $0x8] sm:$0xff]
    %v1639 = vld [vmem:[#allocation8 + $0x10] sm:$0xff]
    %v1640 = vld [vmem:[#allocation8 + $0x18] sm:$0xff]
    %v1641 = vld [vmem:[#allocation8 + $0x20] sm:$0xff]
    %v1642 = vld [vmem:[#allocation8 + $0x28] sm:$0xff]
    %v1643 = vld [vmem:[#allocation8 + $0x30] sm:$0xff]
    %v1644 = vld [vmem:[#allocation8 + $0x38] sm:$0xff]
    %v1645 = vld [vmem:[#allocation8 + $0x40] sm:$0xff]
    %v1646 = vld [vmem:[#allocation8 + $0x48] sm:$0xff]
    %v1647 = vld [vmem:[#allocation8 + $0x50] sm:$0xff]
    %v1648 = vld [vmem:[#allocation8 + $0x58] sm:$0xff]
    %v1649 = vld [vmem:[#allocation8 + $0x60] sm:$0xff]
    %v1650 = vld [vmem:[#allocation8 + $0x68] sm:$0xff]
    %v1651 = vld [vmem:[#allocation8 + $0x70] sm:$0xff]
    %v1652 = vld [vmem:[#allocation8 + $0x78] sm:$0xff]
    %v1653 = vld [vmem:[#allocation8 + $0x80] sm:$0xff]
    %v1654 = vld [vmem:[#allocation8 + $0x88] sm:$0xff]
    %v1655 = vld [vmem:[#allocation8 + $0x90] sm:$0xff]
    %v1656 = vld [vmem:[#allocation8 + $0x98] sm:$0xff]
    %v1657 = vld [vmem:[#allocation8 + $0xa0] sm:$0xff]
    %v1658 = vld [vmem:[#allocation8 + $0xa8] sm:$0xff]
    %v1659 = vld [vmem:[#allocation8 + $0xb0] sm:$0xff]
    %v1660 = vld [vmem:[#allocation8 + $0xb8] sm:$0xff]
    %v1661 = vld [vmem:[#allocation8 + $0xc0] sm:$0xff]
    %v1662 = vld [vmem:[#allocation8 + $0xc8] sm:$0xff]
    %v1663 = vld [vmem:[#allocation8 + $0xd0] sm:$0xff]
    %v1664 = vld [vmem:[#allocation8 + $0xd8] sm:$0xff]
    %v1665 = vld [vmem:[#allocation8 + $0xe0] sm:$0xff]
    %v1666 = vld [vmem:[#allocation8 + $0xe8] sm:$0xff]
    %v1667 = vld [vmem:[#allocation8 + $0xf0] sm:$0xff]
    %v1668 = vld [vmem:[#allocation8 + $0xf8] sm:$0xff]
    %v1669 = vld [vmem:[#allocation8 + $0x100] sm:$0xff]
    %v1670 = vld [vmem:[#allocation8 + $0x108] sm:$0xff]
    %v1671 = vld [vmem:[#allocation8 + $0x110] sm:$0xff]
    %v1672 = vld [vmem:[#allocation8 + $0x118] sm:$0xff]
    %v1673 = vld [vmem:[#allocation8 + $0x120] sm:$0xff]
    %v1674 = vld [vmem:[#allocation8 + $0x128] sm:$0xff]
    %v1675 = vld [vmem:[#allocation8 + $0x130] sm:$0xff]
    %v1676 = vld [vmem:[#allocation8 + $0x138] sm:$0xff]
    %v1677 = vld [vmem:[#allocation8 + $0x140] sm:$0xff]
    %v1678 = vld [vmem:[#allocation8 + $0x148] sm:$0xff]
    %v1679 = vld [vmem:[#allocation8 + $0x150] sm:$0xff]
    %v1680 = vld [vmem:[#allocation8 + $0x158] sm:$0xff]
    %v1681 = vld [vmem:[#allocation8 + $0x160] sm:$0xff]
    %v1682 = vld [vmem:[#allocation8 + $0x168] sm:$0xff]
    %v1683 = vld [vmem:[#allocation8 + $0x170] sm:$0xff]
    %v1684 = vld [vmem:[#allocation8 + $0x178] sm:$0xff]
    %v1685 = vld [vmem:[#allocation8 + $0x180] sm:$0xff]
    %v1686 = vld [vmem:[#allocation8 + $0x188] sm:$0xff]
    %v1687 = vld [vmem:[#allocation8 + $0x190] sm:$0xff]
    %v1688 = vld [vmem:[#allocation8 + $0x198] sm:$0xff]
    %v1689 = vld [vmem:[#allocation8 + $0x1a0] sm:$0xff]
    %v1690 = vld [vmem:[#allocation8 + $0x1a8] sm:$0xff]
    %v1691 = vld [vmem:[#allocation8 + $0x1b0] sm:$0xff]
    %v1692 = vld [vmem:[#allocation8 + $0x1b8] sm:$0xff]
    %v1693 = vld [vmem:[#allocation8 + $0x1c0] sm:$0xff]
    %v1694 = vld [vmem:[#allocation8 + $0x1c8] sm:$0xff]
    %v1695 = vld [vmem:[#allocation8 + $0x1d0] sm:$0xff]
    %v1696 = vld [vmem:[#allocation8 + $0x1d8] sm:$0xff]
    %v1697 = vld [vmem:[#allocation8 + $0x1e0] sm:$0xff]
    %v1698 = vld [vmem:[#allocation8 + $0x1e8] sm:$0xff]
    %v1699 = vld [vmem:[#allocation8 + $0x1f0] sm:$0xff]
    %v1700 = vld [vmem:[#allocation8 + $0x1f8] sm:$0xff]
    %v1701 = vld [vmem:[#allocation8 + $0x200] sm:$0xff]
    %v1702 = vld [vmem:[#allocation8 + $0x208] sm:$0xff]
    %v1703 = vld [vmem:[#allocation8 + $0x210] sm:$0xff]
    %v1704 = vld [vmem:[#allocation8 + $0x218] sm:$0xff]
    %v1705 = vld [vmem:[#allocation8 + $0x220] sm:$0xff]
    %v1706 = vld [vmem:[#allocation8 + $0x228] sm:$0xff]
    %v1707 = vld [vmem:[#allocation8 + $0x230] sm:$0xff]
    %v1708 = vld [vmem:[#allocation8 + $0x238] sm:$0xff]
    %v1709 = vld [vmem:[#allocation8 + $0x240] sm:$0xff]
    %v1710 = vld [vmem:[#allocation8 + $0x248] sm:$0xff]
    %v1711 = vld [vmem:[#allocation8 + $0x250] sm:$0xff]
    %v1712 = vld [vmem:[#allocation8 + $0x258] sm:$0xff]
    %v1713 = vld [vmem:[#allocation8 + $0x260] sm:$0xff]
    %v1714 = vld [vmem:[#allocation8 + $0x268] sm:$0xff]
    %v1715 = vld [vmem:[#allocation8 + $0x270] sm:$0xff]
    %v1716 = vld [vmem:[#allocation8 + $0x278] sm:$0xff]
    %v1717 = vld [vmem:[#allocation8 + $0x280] sm:$0xff]
    %v1718 = vld [vmem:[#allocation8 + $0x288] sm:$0xff]
    %v1719 = vld [vmem:[#allocation8 + $0x290] sm:$0xff]
    %v1720 = vld [vmem:[#allocation8 + $0x298] sm:$0xff]
    %v1721 = vld [vmem:[#allocation8 + $0x2a0] sm:$0xff]
    %v1722 = vld [vmem:[#allocation8 + $0x2a8] sm:$0xff]
    %v1723 = vld [vmem:[#allocation8 + $0x2b0] sm:$0xff]
    %v1724 = vld [vmem:[#allocation8 + $0x2b8] sm:$0xff]
    %v1725 = vld [vmem:[#allocation8 + $0x2c0] sm:$0xff]
    %v1726 = vld [vmem:[#allocation8 + $0x2c8] sm:$0xff]
    %v1727 = vld [vmem:[#allocation8 + $0x2d0] sm:$0xff]
    %v1728 = vld [vmem:[#allocation8 + $0x2d8] sm:$0xff]
    %v1729 = vld [vmem:[#allocation8 + $0x2e0] sm:$0xff]
    %v1730 = vld [vmem:[#allocation8 + $0x2e8] sm:$0xff]
    %v1731 = vld [vmem:[#allocation8 + $0x2f0] sm:$0xff]
    %v1732 = vld [vmem:[#allocation8 + $0x2f8] sm:$0xff]
    %v1733 = vld [vmem:[#allocation8 + $0x300] sm:$0xff]
    %v1734 = vld [vmem:[#allocation8 + $0x308] sm:$0xff]
    %v1735 = vld [vmem:[#allocation8 + $0x310] sm:$0xff]
    %v1736 = vld [vmem:[#allocation8 + $0x318] sm:$0xff]
    %v1737 = vld [vmem:[#allocation8 + $0x320] sm:$0xff]
    %v1738 = vld [vmem:[#allocation8 + $0x328] sm:$0xff]
    %v1739 = vld [vmem:[#allocation8 + $0x330] sm:$0xff]
    %v1740 = vld [vmem:[#allocation8 + $0x338] sm:$0xff]
    %v1741 = vld [vmem:[#allocation8 + $0x340] sm:$0xff]
    %v1742 = vld [vmem:[#allocation8 + $0x348] sm:$0xff]
    %v1743 = vld [vmem:[#allocation8 + $0x350] sm:$0xff]
    %v1744 = vld [vmem:[#allocation8 + $0x358] sm:$0xff]
    %v1745 = vld [vmem:[#allocation8 + $0x360] sm:$0xff]
    %v1746 = vld [vmem:[#allocation8 + $0x368] sm:$0xff]
    %v1747 = vld [vmem:[#allocation8 + $0x370] sm:$0xff]
    %v1748 = vld [vmem:[#allocation8 + $0x378] sm:$0xff]
    %v1749 = vld [vmem:[#allocation8 + $0x380] sm:$0xff]
    %v1750 = vld [vmem:[#allocation8 + $0x388] sm:$0xff]
    %v1751 = vld [vmem:[#allocation8 + $0x390] sm:$0xff]
    %v1752 = vld [vmem:[#allocation8 + $0x398] sm:$0xff]
    %v1753 = vld [vmem:[#allocation8 + $0x3a0] sm:$0xff]
    %v1754 = vld [vmem:[#allocation8 + $0x3a8] sm:$0xff]
    %v1755 = vld [vmem:[#allocation8 + $0x3b0] sm:$0xff]
    %v1756 = vld [vmem:[#allocation8 + $0x3b8] sm:$0xff]
    %v1757 = vld [vmem:[#allocation8 + $0x3c0] sm:$0xff]
    %v1758 = vld [vmem:[#allocation8 + $0x3c8] sm:$0xff]
    %v1759 = vld [vmem:[#allocation8 + $0x3d0] sm:$0xff]
    %v1760 = vld [vmem:[#allocation8 + $0x3d8] sm:$0xff]
    %v1761 = vld [vmem:[#allocation8 + $0x3e0] sm:$0xff]
    %v1762 = vld [vmem:[#allocation8 + $0x3e8] sm:$0xff]
    %v1763 = vld [vmem:[#allocation8 + $0x3f0] sm:$0xff]
    %v1764 = vld [vmem:[#allocation8 + $0x3f8] sm:$0xff]
    %v1765 = vld [vmem:[%s6] sm:$0x1]
    %v1766 = vlaneseq
    %v1767 = vshrl.u32 %v1766, 7
    %v1768 = vsub.s32 0, %v1767
    %v1769 = vrot.slane %v1765, %v1768
    %1770 = vmatprep.subr.mxu0 0.0
    %1771 = vmatpush1.msra.mxu0 %v1652
    %1772 = vmatprep.subr.mxu0 0.0
    %1773 = vmatpush1.msra.mxu0 %v1651
    %1774 = vmatprep.subr.mxu0 0.0
    %1775 = vmatpush1.msra.mxu0 %v1650
    %1776 = vmatprep.subr.mxu0 0.0
    %1777 = vmatpush1.msra.mxu0 %v1649
    %1778 = vmatprep.subr.mxu0 0.0
    %1779 = vmatpush1.msra.mxu0 %v1648
    %1780 = vmatprep.subr.mxu0 0.0
    %1781 = vmatpush1.msra.mxu0 %v1647
    %1782 = vmatprep.subr.mxu0 0.0
    %1783 = vmatpush1.msra.mxu0 %v1646
    %1784 = vmatprep.subr.mxu0 0.0
    %1785 = vmatpush1.msra.mxu0 %v1645
    %1786 = vmatprep.subr.mxu0 0.0
    %1787 = vmatpush1.msra.mxu0 %v1644
    %1788 = vmatprep.subr.mxu0 0.0
    %1789 = vmatpush1.msra.mxu0 %v1643
    %1790 = vmatprep.subr.mxu0 0.0
    %1791 = vmatpush1.msra.mxu0 %v1642
    %1792 = vmatprep.subr.mxu0 0.0
    %1793 = vmatpush1.msra.mxu0 %v1641
    %1794 = vmatprep.subr.mxu0 0.0
    %1795 = vmatpush1.msra.mxu0 %v1640
    %1796 = vmatprep.subr.mxu0 0.0
    %1797 = vmatpush1.msra.mxu0 %v1639
    %1798 = vmatprep.subr.mxu0 0.0
    %1799 = vmatpush1.msra.mxu0 %v1638
    %1800 = vmatprep.subr.mxu0 0.0
    %1801 = vmatpush1.msra.mxu0 %v1637
    %1802 = vmatprep.subr.mxu0 0.0
    %1803 = vmatpush2.msra.mxu0 %v1668
    %1804 = vmatprep.subr.mxu0 0.0
    %1805 = vmatpush2.msra.mxu0 %v1667
    %1806 = vmatprep.subr.mxu0 0.0
    %1807 = vmatpush2.msra.mxu0 %v1666
    %1808 = vmatprep.subr.mxu0 0.0
    %1809 = vmatpush2.msra.mxu0 %v1665
    %1810 = vmatprep.subr.mxu0 0.0
    %1811 = vmatpush2.msra.mxu0 %v1664
    %1812 = vmatprep.subr.mxu0 0.0
    %1813 = vmatpush2.msra.mxu0 %v1663
    %1814 = vmatprep.subr.mxu0 0.0
    %1815 = vmatpush2.msra.mxu0 %v1662
    %1816 = vmatprep.subr.mxu0 0.0
    %1817 = vmatpush2.msra.mxu0 %v1661
    %1818 = vmatprep.subr.mxu0 0.0
    %1819 = vmatpush2.msra.mxu0 %v1660
    %1820 = vmatprep.subr.mxu0 0.0
    %1821 = vmatpush2.msra.mxu0 %v1659
    %1822 = vmatprep.subr.mxu0 0.0
    %1823 = vmatpush2.msra.mxu0 %v1658
    %1824 = vmatprep.subr.mxu0 0.0
    %1825 = vmatpush2.msra.mxu0 %v1657
    %1826 = vmatprep.subr.mxu0 0.0
    %1827 = vmatpush2.msra.mxu0 %v1656
    %1828 = vmatprep.subr.mxu0 0.0
    %1829 = vmatpush2.msra.mxu0 %v1655
    %1830 = vmatprep.subr.mxu0 0.0
    %1831 = vmatpush2.msra.mxu0 %v1654
    %1832 = vmatprep.subr.mxu0 0.0
    %1833 = vmatpush2.msra.mxu0 %v1653
    %1834 = vmatprep.mubr.f32.mxu0 %v1630
    %1835 = vmatmul.mubr.f32.gmra.mxu0 %v1629
    %v1836 = vpop.f32.mrf.mxu0
    %v1837 = vadd.f32 %v1769, %v1836
    %v1838 = vpop.f32.mrf.mxu0
    %1839 = vdwg.mxu0
    %1840 = vmatprep.subr.mxu0 0.0
    %1841 = vmatpush1.msra.mxu0 %v1684
    %1842 = vmatprep.subr.mxu0 0.0
    %1843 = vmatpush1.msra.mxu0 %v1683
    %1844 = vmatprep.subr.mxu0 0.0
    %1845 = vmatpush1.msra.mxu0 %v1682
    %1846 = vmatprep.subr.mxu0 0.0
    %1847 = vmatpush1.msra.mxu0 %v1681
    %1848 = vmatprep.subr.mxu0 0.0
    %1849 = vmatpush1.msra.mxu0 %v1680
    %1850 = vmatprep.subr.mxu0 0.0
    %1851 = vmatpush1.msra.mxu0 %v1679
    %1852 = vmatprep.subr.mxu0 0.0
    %1853 = vmatpush1.msra.mxu0 %v1678
    %1854 = vmatprep.subr.mxu0 0.0
    %1855 = vmatpush1.msra.mxu0 %v1677
    %1856 = vmatprep.subr.mxu0 0.0
    %1857 = vmatpush1.msra.mxu0 %v1676
    %1858 = vmatprep.subr.mxu0 0.0
    %1859 = vmatpush1.msra.mxu0 %v1675
    %1860 = vmatprep.subr.mxu0 0.0
    %1861 = vmatpush1.msra.mxu0 %v1674
    %1862 = vmatprep.subr.mxu0 0.0
    %1863 = vmatpush1.msra.mxu0 %v1673
    %1864 = vmatprep.subr.mxu0 0.0
    %1865 = vmatpush1.msra.mxu0 %v1672
    %1866 = vmatprep.subr.mxu0 0.0
    %1867 = vmatpush1.msra.mxu0 %v1671
    %1868 = vmatprep.subr.mxu0 0.0
    %1869 = vmatpush1.msra.mxu0 %v1670
    %1870 = vmatprep.subr.mxu0 0.0
    %1871 = vmatpush1.msra.mxu0 %v1669
    %1872 = vmatprep.subr.mxu0 0.0
    %1873 = vmatpush2.msra.mxu0 %v1700
    %1874 = vmatprep.subr.mxu0 0.0
    %1875 = vmatpush2.msra.mxu0 %v1699
    %1876 = vmatprep.subr.mxu0 0.0
    %1877 = vmatpush2.msra.mxu0 %v1698
    %1878 = vmatprep.subr.mxu0 0.0
    %1879 = vmatpush2.msra.mxu0 %v1697
    %1880 = vmatprep.subr.mxu0 0.0
    %1881 = vmatpush2.msra.mxu0 %v1696
    %1882 = vmatprep.subr.mxu0 0.0
    %1883 = vmatpush2.msra.mxu0 %v1695
    %1884 = vmatprep.subr.mxu0 0.0
    %1885 = vmatpush2.msra.mxu0 %v1694
    %1886 = vmatprep.subr.mxu0 0.0
    %1887 = vmatpush2.msra.mxu0 %v1693
    %1888 = vmatprep.subr.mxu0 0.0
    %1889 = vmatpush2.msra.mxu0 %v1692
    %1890 = vmatprep.subr.mxu0 0.0
    %1891 = vmatpush2.msra.mxu0 %v1691
    %1892 = vmatprep.subr.mxu0 0.0
    %1893 = vmatpush2.msra.mxu0 %v1690
    %1894 = vmatprep.subr.mxu0 0.0
    %1895 = vmatpush2.msra.mxu0 %v1689
    %1896 = vmatprep.subr.mxu0 0.0
    %1897 = vmatpush2.msra.mxu0 %v1688
    %1898 = vmatprep.subr.mxu0 0.0
    %1899 = vmatpush2.msra.mxu0 %v1687
    %1900 = vmatprep.subr.mxu0 0.0
    %1901 = vmatpush2.msra.mxu0 %v1686
    %1902 = vmatprep.subr.mxu0 0.0
    %1903 = vmatpush2.msra.mxu0 %v1685
    %1904 = vmatprep.mubr.f32.mxu0 %v1632
    %1905 = vmatmul.mubr.f32.gmra.mxu0 %v1631
    %v1906 = vpop.f32.mrf.mxu0
    %v1907 = vadd.f32 %v1837, %v1906
    %v1908 = vpop.f32.mrf.mxu0
    %1909 = vdwg.mxu0
    %1910 = vmatprep.subr.mxu0 0.0
    %1911 = vmatpush1.msra.mxu0 %v1716
    %1912 = vmatprep.subr.mxu0 0.0
    %1913 = vmatpush1.msra.mxu0 %v1715
    %1914 = vmatprep.subr.mxu0 0.0
    %1915 = vmatpush1.msra.mxu0 %v1714
    %1916 = vmatprep.subr.mxu0 0.0
    %1917 = vmatpush1.msra.mxu0 %v1713
    %1918 = vmatprep.subr.mxu0 0.0
    %1919 = vmatpush1.msra.mxu0 %v1712
    %1920 = vmatprep.subr.mxu0 0.0
    %1921 = vmatpush1.msra.mxu0 %v1711
    %1922 = vmatprep.subr.mxu0 0.0
    %1923 = vmatpush1.msra.mxu0 %v1710
    %1924 = vmatprep.subr.mxu0 0.0
    %1925 = vmatpush1.msra.mxu0 %v1709
    %1926 = vmatprep.subr.mxu0 0.0
    %1927 = vmatpush1.msra.mxu0 %v1708
    %1928 = vmatprep.subr.mxu0 0.0
    %1929 = vmatpush1.msra.mxu0 %v1707
    %1930 = vmatprep.subr.mxu0 0.0
    %1931 = vmatpush1.msra.mxu0 %v1706
    %1932 = vmatprep.subr.mxu0 0.0
    %1933 = vmatpush1.msra.mxu0 %v1705
    %1934 = vmatprep.subr.mxu0 0.0
    %1935 = vmatpush1.msra.mxu0 %v1704
    %1936 = vmatprep.subr.mxu0 0.0
    %1937 = vmatpush1.msra.mxu0 %v1703
    %1938 = vmatprep.subr.mxu0 0.0
    %1939 = vmatpush1.msra.mxu0 %v1702
    %1940 = vmatprep.subr.mxu0 0.0
    %1941 = vmatpush1.msra.mxu0 %v1701
    %1942 = vmatprep.subr.mxu0 0.0
    %1943 = vmatpush2.msra.mxu0 %v1732
    %1944 = vmatprep.subr.mxu0 0.0
    %1945 = vmatpush2.msra.mxu0 %v1731
    %1946 = vmatprep.subr.mxu0 0.0
    %1947 = vmatpush2.msra.mxu0 %v1730
    %1948 = vmatprep.subr.mxu0 0.0
    %1949 = vmatpush2.msra.mxu0 %v1729
    %1950 = vmatprep.subr.mxu0 0.0
    %1951 = vmatpush2.msra.mxu0 %v1728
    %1952 = vmatprep.subr.mxu0 0.0
    %1953 = vmatpush2.msra.mxu0 %v1727
    %1954 = vmatprep.subr.mxu0 0.0
    %1955 = vmatpush2.msra.mxu0 %v1726
    %1956 = vmatprep.subr.mxu0 0.0
    %1957 = vmatpush2.msra.mxu0 %v1725
    %1958 = vmatprep.subr.mxu0 0.0
    %1959 = vmatpush2.msra.mxu0 %v1724
    %1960 = vmatprep.subr.mxu0 0.0
    %1961 = vmatpush2.msra.mxu0 %v1723
    %1962 = vmatprep.subr.mxu0 0.0
    %1963 = vmatpush2.msra.mxu0 %v1722
    %1964 = vmatprep.subr.mxu0 0.0
    %1965 = vmatpush2.msra.mxu0 %v1721
    %1966 = vmatprep.subr.mxu0 0.0
    %1967 = vmatpush2.msra.mxu0 %v1720
    %1968 = vmatprep.subr.mxu0 0.0
    %1969 = vmatpush2.msra.mxu0 %v1719
    %1970 = vmatprep.subr.mxu0 0.0
    %1971 = vmatpush2.msra.mxu0 %v1718
    %1972 = vmatprep.subr.mxu0 0.0
    %1973 = vmatpush2.msra.mxu0 %v1717
    %1974 = vmatprep.mubr.f32.mxu0 %v1634
    %1975 = vmatmul.mubr.f32.gmra.mxu0 %v1633
    %v1976 = vpop.f32.mrf.mxu0
    %v1977 = vadd.f32 %v1907, %v1976
    %v1978 = vpop.f32.mrf.mxu0
    %1979 = vdwg.mxu0
    %1980 = vmatprep.subr.mxu0 0.0
    %1981 = vmatpush1.msra.mxu0 %v1748
    %1982 = vmatprep.subr.mxu0 0.0
    %1983 = vmatpush1.msra.mxu0 %v1747
    %1984 = vmatprep.subr.mxu0 0.0
    %1985 = vmatpush1.msra.mxu0 %v1746
    %1986 = vmatprep.subr.mxu0 0.0
    %1987 = vmatpush1.msra.mxu0 %v1745
    %1988 = vmatprep.subr.mxu0 0.0
    %1989 = vmatpush1.msra.mxu0 %v1744
    %1990 = vmatprep.subr.mxu0 0.0
    %1991 = vmatpush1.msra.mxu0 %v1743
    %1992 = vmatprep.subr.mxu0 0.0
    %1993 = vmatpush1.msra.mxu0 %v1742
    %1994 = vmatprep.subr.mxu0 0.0
    %1995 = vmatpush1.msra.mxu0 %v1741
    %1996 = vmatprep.subr.mxu0 0.0
    %1997 = vmatpush1.msra.mxu0 %v1740
    %1998 = vmatprep.subr.mxu0 0.0
    %1999 = vmatpush1.msra.mxu0 %v1739
    %2000 = vmatprep.subr.mxu0 0.0
    %2001 = vmatpush1.msra.mxu0 %v1738
    %2002 = vmatprep.subr.mxu0 0.0
    %2003 = vmatpush1.msra.mxu0 %v1737
    %2004 = vmatprep.subr.mxu0 0.0
    %2005 = vmatpush1.msra.mxu0 %v1736
    %2006 = vmatprep.subr.mxu0 0.0
    %2007 = vmatpush1.msra.mxu0 %v1735
    %2008 = vmatprep.subr.mxu0 0.0
    %2009 = vmatpush1.msra.mxu0 %v1734
    %2010 = vmatprep.subr.mxu0 0.0
    %2011 = vmatpush1.msra.mxu0 %v1733
    %2012 = vmatprep.subr.mxu0 0.0
    %2013 = vmatpush2.msra.mxu0 %v1764
    %2014 = vmatprep.subr.mxu0 0.0
    %2015 = vmatpush2.msra.mxu0 %v1763
    %2016 = vmatprep.subr.mxu0 0.0
    %2017 = vmatpush2.msra.mxu0 %v1762
    %2018 = vmatprep.subr.mxu0 0.0
    %2019 = vmatpush2.msra.mxu0 %v1761
    %2020 = vmatprep.subr.mxu0 0.0
    %2021 = vmatpush2.msra.mxu0 %v1760
    %2022 = vmatprep.subr.mxu0 0.0
    %2023 = vmatpush2.msra.mxu0 %v1759
    %2024 = vmatprep.subr.mxu0 0.0
    %2025 = vmatpush2.msra.mxu0 %v1758
    %2026 = vmatprep.subr.mxu0 0.0
    %2027 = vmatpush2.msra.mxu0 %v1757
    %2028 = vmatprep.subr.mxu0 0.0
    %2029 = vmatpush2.msra.mxu0 %v1756
    %2030 = vmatprep.subr.mxu0 0.0
    %2031 = vmatpush2.msra.mxu0 %v1755
    %2032 = vmatprep.subr.mxu0 0.0
    %2033 = vmatpush2.msra.mxu0 %v1754
    %2034 = vmatprep.subr.mxu0 0.0
    %2035 = vmatpush2.msra.mxu0 %v1753
    %2036 = vmatprep.subr.mxu0 0.0
    %2037 = vmatpush2.msra.mxu0 %v1752
    %2038 = vmatprep.subr.mxu0 0.0
    %2039 = vmatpush2.msra.mxu0 %v1751
    %2040 = vmatprep.subr.mxu0 0.0
    %2041 = vmatpush2.msra.mxu0 %v1750
    %2042 = vmatprep.subr.mxu0 0.0
    %2043 = vmatpush2.msra.mxu0 %v1749
    %2044 = vmatprep.mubr.f32.mxu0 %v1636
    %2045 = vmatmul.mubr.f32.gmra.mxu0 %v1635
    %v2046 = vpop.f32.mrf.mxu0
    %v2047 = vadd.f32 %v1977, %v2046
    %v2048 = vpop.f32.mrf.mxu0
    %2049 = vdwg.mxu0
    %v2050 = vmax.f32 %v2047, 0.0
    %v2051 = vld [vmem:[#allocation10] sm:$0xff]
    %v2052 = vld [vmem:[#allocation10 + $0x8] sm:$0xff]
    %v2053 = vld [vmem:[#allocation10 + $0x10] sm:$0xff]
    %v2054 = vld [vmem:[#allocation10 + $0x18] sm:$0xff]
    %v2055 = vld [vmem:[#allocation10 + $0x20] sm:$0xff]
    %v2056 = vld [vmem:[#allocation10 + $0x28] sm:$0xff]
    %v2057 = vld [vmem:[#allocation10 + $0x30] sm:$0xff]
    %v2058 = vld [vmem:[#allocation10 + $0x38] sm:$0xff]
    %v2059 = vld [vmem:[#allocation10 + $0x40] sm:$0xff]
    %v2060 = vld [vmem:[#allocation10 + $0x48] sm:$0xff]
    %v2061 = vld [vmem:[#allocation10 + $0x50] sm:$0xff]
    %v2062 = vld [vmem:[#allocation10 + $0x58] sm:$0xff]
    %v2063 = vld [vmem:[#allocation10 + $0x60] sm:$0xff]
    %v2064 = vld [vmem:[#allocation10 + $0x68] sm:$0xff]
    %v2065 = vld [vmem:[#allocation10 + $0x70] sm:$0xff]
    %v2066 = vld [vmem:[#allocation10 + $0x78] sm:$0xff]
    %v2067 = vld [vmem:[#allocation11] sm:$0xff]
    %v2068 = vld [vmem:[#allocation11 + $0x8] sm:$0xff]
    %v2069 = vld [vmem:[#allocation11 + $0x10] sm:$0xff]
    %v2070 = vld [vmem:[#allocation11 + $0x18] sm:$0xff]
    %v2071 = vld [vmem:[#allocation11 + $0x20] sm:$0xff]
    %v2072 = vld [vmem:[#allocation11 + $0x28] sm:$0xff]
    %v2073 = vld [vmem:[#allocation11 + $0x30] sm:$0xff]
    %v2074 = vld [vmem:[#allocation11 + $0x38] sm:$0xff]
    %v2075 = vld [vmem:[#allocation11 + $0x40] sm:$0xff]
    %v2076 = vld [vmem:[#allocation11 + $0x48] sm:$0xff]
    %v2077 = vld [vmem:[#allocation11 + $0x50] sm:$0xff]
    %v2078 = vld [vmem:[#allocation11 + $0x58] sm:$0xff]
    %v2079 = vld [vmem:[#allocation11 + $0x60] sm:$0xff]
    %v2080 = vld [vmem:[#allocation11 + $0x68] sm:$0xff]
    %v2081 = vld [vmem:[#allocation11 + $0x70] sm:$0xff]
    %v2082 = vld [vmem:[#allocation11 + $0x78] sm:$0xff]
    %2083 = vmatprep.subr.mxu0 0.0
    %2084 = vmatpush1.msra.mxu0 %v2082
    %2085 = vmatprep.subr.mxu0 0.0
    %2086 = vmatpush1.msra.mxu0 %v2081
    %2087 = vmatprep.subr.mxu0 0.0
    %2088 = vmatpush1.msra.mxu0 %v2080
    %2089 = vmatprep.subr.mxu0 0.0
    %2090 = vmatpush1.msra.mxu0 %v2079
    %2091 = vmatprep.subr.mxu0 0.0
    %2092 = vmatpush1.msra.mxu0 %v2078
    %2093 = vmatprep.subr.mxu0 0.0
    %2094 = vmatpush1.msra.mxu0 %v2077
    %2095 = vmatprep.subr.mxu0 0.0
    %2096 = vmatpush1.msra.mxu0 %v2076
    %2097 = vmatprep.subr.mxu0 0.0
    %2098 = vmatpush1.msra.mxu0 %v2075
    %2099 = vmatprep.subr.mxu0 0.0
    %2100 = vmatpush1.msra.mxu0 %v2074
    %2101 = vmatprep.subr.mxu0 0.0
    %2102 = vmatpush1.msra.mxu0 %v2073
    %2103 = vmatprep.subr.mxu0 0.0
    %2104 = vmatpush1.msra.mxu0 %v2072
    %2105 = vmatprep.subr.mxu0 0.0
    %2106 = vmatpush1.msra.mxu0 %v2071
    %2107 = vmatprep.subr.mxu0 0.0
    %2108 = vmatpush1.msra.mxu0 %v2070
    %2109 = vmatprep.subr.mxu0 0.0
    %2110 = vmatpush1.msra.mxu0 %v2069
    %2111 = vmatprep.subr.mxu0 0.0
    %2112 = vmatpush1.msra.mxu0 %v2068
    %2113 = vmatprep.subr.mxu0 0.0
    %2114 = vmatpush1.msra.mxu0 %v2067
    %2115 = vmatprep.subr.mxu0 0.0
    %2116 = vmatpush2.msra.mxu0 0.0
    %2117 = vmatprep.subr.mxu0 0.0
    %2118 = vmatpush2.msra.mxu0 0.0
    %2119 = vmatprep.subr.mxu0 0.0
    %2120 = vmatpush2.msra.mxu0 0.0
    %2121 = vmatprep.subr.mxu0 0.0
    %2122 = vmatpush2.msra.mxu0 0.0
    %2123 = vmatprep.subr.mxu0 0.0
    %2124 = vmatpush2.msra.mxu0 0.0
    %2125 = vmatprep.subr.mxu0 0.0
    %2126 = vmatpush2.msra.mxu0 0.0
    %2127 = vmatprep.subr.mxu0 0.0
    %2128 = vmatpush2.msra.mxu0 0.0
    %2129 = vmatprep.subr.mxu0 0.0
    %2130 = vmatpush2.msra.mxu0 0.0
    %2131 = vmatprep.subr.mxu0 0.0
    %2132 = vmatpush2.msra.mxu0 0.0
    %2133 = vmatprep.subr.mxu0 0.0
    %2134 = vmatpush2.msra.mxu0 0.0
    %2135 = vmatprep.subr.mxu0 0.0
    %2136 = vmatpush2.msra.mxu0 0.0
    %2137 = vmatprep.subr.mxu0 0.0
    %2138 = vmatpush2.msra.mxu0 0.0
    %2139 = vmatprep.subr.mxu0 0.0
    %2140 = vmatpush2.msra.mxu0 0.0
    %2141 = vmatprep.subr.mxu0 0.0
    %2142 = vmatpush2.msra.mxu0 0.0
    %2143 = vmatprep.subr.mxu0 0.0
    %2144 = vmatpush2.msra.mxu0 0.0
    %2145 = vmatprep.subr.mxu0 0.0
    %2146 = vmatpush2.msra.mxu0 0.0
    %2147 = vmatprep.mubr.f32.mxu0 0.0
    %2148 = vmatmul.mubr.f32.gmra.mxu0 %v2050
    %v2149 = vpop.f32.mrf.mxu0
    %v2150 = vadd.f32 0.0, %v2149
    %v2151 = vpop.f32.mrf.mxu0
    %2152 = vdwg.mxu0
    %2153 = vmatprep.subr.mxu0 0.0
    %2154 = vmatpush1.msra.mxu0 %v2066
    %2155 = vmatprep.subr.mxu0 0.0
    %2156 = vmatpush1.msra.mxu0 %v2065
    %2157 = vmatprep.subr.mxu0 0.0
    %2158 = vmatpush1.msra.mxu0 %v2064
    %2159 = vmatprep.subr.mxu0 0.0
    %2160 = vmatpush1.msra.mxu0 %v2063
    %2161 = vmatprep.subr.mxu0 0.0
    %2162 = vmatpush1.msra.mxu0 %v2062
    %2163 = vmatprep.subr.mxu0 0.0
    %2164 = vmatpush1.msra.mxu0 %v2061
    %2165 = vmatprep.subr.mxu0 0.0
    %2166 = vmatpush1.msra.mxu0 %v2060
    %2167 = vmatprep.subr.mxu0 0.0
    %2168 = vmatpush1.msra.mxu0 %v2059
    %2169 = vmatprep.subr.mxu0 0.0
    %2170 = vmatpush1.msra.mxu0 %v2058
    %2171 = vmatprep.subr.mxu0 0.0
    %2172 = vmatpush1.msra.mxu0 %v2057
    %2173 = vmatprep.subr.mxu0 0.0
    %2174 = vmatpush1.msra.mxu0 %v2056
    %2175 = vmatprep.subr.mxu0 0.0
    %2176 = vmatpush1.msra.mxu0 %v2055
    %2177 = vmatprep.subr.mxu0 0.0
    %2178 = vmatpush1.msra.mxu0 %v2054
    %2179 = vmatprep.subr.mxu0 0.0
    %2180 = vmatpush1.msra.mxu0 %v2053
    %2181 = vmatprep.subr.mxu0 0.0
    %2182 = vmatpush1.msra.mxu0 %v2052
    %2183 = vmatprep.subr.mxu0 0.0
    %2184 = vmatpush1.msra.mxu0 %v2051
    %2185 = vmatprep.subr.mxu0 0.0
    %2186 = vmatpush2.msra.mxu0 0.0
    %2187 = vmatprep.subr.mxu0 0.0
    %2188 = vmatpush2.msra.mxu0 0.0
    %2189 = vmatprep.subr.mxu0 0.0
    %2190 = vmatpush2.msra.mxu0 0.0
    %2191 = vmatprep.subr.mxu0 0.0
    %2192 = vmatpush2.msra.mxu0 0.0
    %2193 = vmatprep.subr.mxu0 0.0
    %2194 = vmatpush2.msra.mxu0 0.0
    %2195 = vmatprep.subr.mxu0 0.0
    %2196 = vmatpush2.msra.mxu0 0.0
    %2197 = vmatprep.subr.mxu0 0.0
    %2198 = vmatpush2.msra.mxu0 0.0
    %2199 = vmatprep.subr.mxu0 0.0
    %2200 = vmatpush2.msra.mxu0 0.0
    %2201 = vmatprep.subr.mxu0 0.0
    %2202 = vmatpush2.msra.mxu0 0.0
    %2203 = vmatprep.subr.mxu0 0.0
    %2204 = vmatpush2.msra.mxu0 0.0
    %2205 = vmatprep.subr.mxu0 0.0
    %2206 = vmatpush2.msra.mxu0 0.0
    %2207 = vmatprep.subr.mxu0 0.0
    %2208 = vmatpush2.msra.mxu0 0.0
    %2209 = vmatprep.subr.mxu0 0.0
    %2210 = vmatpush2.msra.mxu0 0.0
    %2211 = vmatprep.subr.mxu0 0.0
    %2212 = vmatpush2.msra.mxu0 0.0
    %2213 = vmatprep.subr.mxu0 0.0
    %2214 = vmatpush2.msra.mxu0 0.0
    %2215 = vmatprep.subr.mxu0 0.0
    %2216 = vmatpush2.msra.mxu0 0.0
    %2217 = vmatprep.mubr.f32.mxu0 0.0
    %2218 = vmatmul.mubr.f32.gmra.mxu0 %v1622
    %v2219 = vpop.f32.mrf.mxu0
    %v2220 = vadd.f32 %v2150, %v2219
    %v2221 = vpop.f32.mrf.mxu0
    %2222 = vdwg.mxu0
    %v2223 = vld [vmem:[%s6 + $0x1] sm:$0x1]
    %v2224 = vlaneseq
    %v2225 = vshrl.u32 %v2224, 7
    %v2226 = vsub.s32 0, %v2225
    %v2227 = vrot.slane %v2223, %v2226
    %v2228 = vadd.f32 %v2220, %v2227
    %2229 = vst [vmem:[#allocation13] sm:$0xff] %v2228
    // Predicated region
    $region54: #{tpu_custom_call.1} parent=1 // pred_check
      _
    $region55: #{tpu_custom_call.1} parent=1 // pred_check_branch
      %2231 = sbr.rel (0) target = $region57
    $region56: #{tpu_custom_call.1} parent=1 // pred_region
      %s2233 = ssub.s32 128, 128
      %2234 = vsyncadd [#allocation4], %s2233
      %s2236 = sshll.u32 [#allocation13], 4
      %s2237 = int_to_ptr.vmem [resolvable:$true] %s2236
      %2239 = dma.vmem_to_hbm [thread:$0]  %s2237, 128, %s7, [#allocation4]
    $region57: #{tpu_custom_call.1} parent=1 // pred_fallthru
      _
    // Predicated region
    $region58: #{tpu_custom_call.1} parent=1 // pred_check
      _
    $region59: #{tpu_custom_call.1} parent=1 // pred_check_branch
      %2241 = sbr.rel (0) target = $region61
    $region60: #{tpu_custom_call.1} parent=1 // pred_region
      %2242 = dma.done [#allocation4], 128
    $region61: #{tpu_custom_call.1} parent=1 // pred_fallthru
      _
    %2243 = vsyncpa [#allocation3], 1
    %2244 = vsyncpa [#allocation6], 1
    %2245 = vsyncpa [#allocation9], 1
    %2246 = vsyncpa [#allocation12], 1
    %2247 = vsyncpa [#allocation4], 1

</llo_original>
